<compile_context>
chip_gen: v7x
topology: tpu7x:2x2x1
jax: 0.10.0
libtpu: 0.0.40
codegen_flags: <defaults>
</compile_context>

<pallas_src>
import math
import jax
import jax.numpy as jnp
from jax.experimental import pallas as pl
from jax.experimental.pallas import tpu as pltpu  # noqa: F401  (not needed at this size)

# Model hyper-parameters (small, consistent with the module's __init__)
S, B, D, H = 8, 2, 32, 4          # seq, batch, d_model, nhead
HD = D // H                        # head dim
N = S * B                          # flattened token count (seq-major: row = s*B + b)
EPS = 1e-5


def decoder_block_kernel(
    x_ref,       # (N, D)   flattened tokens, seq-major (row i -> token (s=i//B, b=i%B))
    wqkv_ref,    # (D, 3D)  [Wq*scale | Wk | Wv] in x@W form
    wrest_ref,   # (3D, D)  [Wout ; W1 ; W2] stacked on sublanes, x@W form
    b_ref,       # (10, D)  rows: bq*scale, bk, bv, bo, g1, be1, fb1, fb2, g2, be2
    o_ref,       # (N, D)
):
    x = x_ref[...].astype(jnp.float32)                                   # (N, D)
    b = b_ref[...]                                                       # (10, D)

    # ---- fused QKV projection: one 16x32x96 MXU push ----
    qkv = jnp.dot(x, wqkv_ref[...], preferred_element_type=jnp.float32)  # (N, 3D)
    q = qkv[:, 0 * D:1 * D] + b[0:1, :]    # 1/sqrt(head_dim) pre-folded into Wq/bq
    k = qkv[:, 1 * D:2 * D] + b[1:2, :]
    v = qkv[:, 2 * D:3 * D] + b[2:3, :]

    # ---- additive mask restricting attention within each sequence ----
    # rows are seq-major, so the batch id of row i is (i % B); exp(-1e30 - max) == 0,
    # hence cross-batch keys get exactly zero weight (identical to per-batch softmax).
    rid = jax.lax.broadcasted_iota(jnp.int32, (N, N), 0)
    cid = jax.lax.broadcasted_iota(jnp.int32, (N, N), 1)
    mask = jnp.where((rid % B) == (cid % B), 0.0, -1e30).astype(jnp.float32)

    # ---- per-head attention over all tokens at once (static unroll over 4 heads) ----
    head_outs = []
    for h in range(H):
        cols = slice(h * HD, (h + 1) * HD)
        qh, kh, vh = q[:, cols], k[:, cols], v[:, cols]                  # (N, HD)
        # NT contraction (contract dim 1 of both): no explicit K transpose (no XLU vxpose).
        s = jax.lax.dot_general(qh, kh, (((1,), (1,)), ((), ())),
                                preferred_element_type=jnp.float32)      # (N, N)
        s = s + mask
        s = s - jnp.max(s, axis=-1, keepdims=True)
        p = jnp.exp(s)
        p = p * pl.reciprocal(jnp.sum(p, axis=-1, keepdims=True), approx=True)
        head_outs.append(jnp.dot(p, vh, preferred_element_type=jnp.float32))  # (N, HD)

    # ---- heads combined via one fused out-projection (single MXU push) ----
    attn = jnp.concatenate(head_outs, axis=-1)                           # (N, D)
    attn = jnp.dot(attn, wrest_ref[0:D, :],
                   preferred_element_type=jnp.float32) + b[3:4, :]       # (N, D)

    def layer_norm(z, g, beta):
        mu = jnp.mean(z, axis=-1, keepdims=True)
        c = z - mu
        var = jnp.mean(c * c, axis=-1, keepdims=True)
        return c * jax.lax.rsqrt(var + EPS) * g + beta

    # ---- residual + norm1 (dropout == identity, eval mode) ----
    x1 = layer_norm(x + attn, b[4:5, :], b[5:6, :])                      # (N, D)

    # ---- feed-forward (Linear -> ReLU -> Linear, hidden width == d_model per spec) ----
    h1 = jnp.dot(x1, wrest_ref[D:2 * D, :],
                 preferred_element_type=jnp.float32) + b[6:7, :]
    h1 = jnp.maximum(h1, 0.0)
    h2 = jnp.dot(h1, wrest_ref[2 * D:3 * D, :],
                 preferred_element_type=jnp.float32) + b[7:8, :]

    # ---- residual + norm2 ----
    y = layer_norm(x1 + h2, b[8:9, :], b[9:10, :])                       # (N, D)
    o_ref[...] = y.astype(o_ref.dtype)


def transformer_decoder_block(x, params):
    """x: (S, B, D) float32 (seq-first, PyTorch batch_first=False) -> (S, B, D)."""
    w_qkv, w_rest, b_slab = params
    x2d = x.reshape(N, D)            # free XLA-side reshape; rows are seq-major (s, b)
    out2d = pl.pallas_call(
        decoder_block_kernel,
        out_shape=jax.ShapeDtypeStruct((N, D), x.dtype),
        # No grid: single invocation, all operands resident in VMEM (< 100 KiB total).
        # TODO(synk): at production sizes (D>=512, long S) this needs BlockSpec tiling
        # (>= (128,128) lane-dense tiles) and a parallel grid axis to use both v7x TCs.
    )(x2d, w_qkv, w_rest, b_slab)
    return out2d.reshape(S, B, D)


def init_params(key):
    ks = jax.random.split(key, 8)
    scale = 0.02
    # nn.MultiheadAttention parameters
    in_proj_w = scale * jax.random.normal(ks[0], (3 * D, D), jnp.float32)   # (3D, D)
    in_proj_b = scale * jax.random.normal(ks[1], (3 * D,), jnp.float32)
    out_proj_w = scale * jax.random.normal(ks[2], (D, D), jnp.float32)
    out_proj_b = scale * jax.random.normal(ks[3], (D,), jnp.float32)
    # LayerNorms
    g1 = jnp.ones((D,), jnp.float32);  be1 = jnp.zeros((D,), jnp.float32)
    g2 = jnp.ones((D,), jnp.float32);  be2 = jnp.zeros((D,), jnp.float32)
    # MLP (both Linear layers are d_model -> d_model, matching the module)
    w1 = scale * jax.random.normal(ks[4], (D, D), jnp.float32)
    b1 = scale * jax.random.normal(ks[5], (D,), jnp.float32)
    w2 = scale * jax.random.normal(ks[6], (D, D), jnp.float32)
    b2 = scale * jax.random.normal(ks[7], (D,), jnp.float32)

    # Pre-split in_proj into Q/K/V, pre-transpose to x@W form, fold 1/sqrt(head_dim)
    # into the Q weight/bias, then PACK everything into 3 operands.
    attn_scale = 1.0 / math.sqrt(HD)
    wq = in_proj_w[:D, :].T * attn_scale
    wk = in_proj_w[D:2 * D, :].T
    wv = in_proj_w[2 * D:, :].T
    bq = in_proj_b[:D] * attn_scale
    bk = in_proj_b[D:2 * D]
    bv = in_proj_b[2 * D:]

    w_qkv = jnp.concatenate([wq, wk, wv], axis=1)                        # (D, 3D)
    w_rest = jnp.concatenate([out_proj_w.T, w1.T, w2.T], axis=0)         # (3D, D)
    b_slab = jnp.stack([bq, bk, bv, out_proj_b,
                        g1, be1, b1, b2, g2, be2], axis=0)               # (10, D)
    return w_qkv, w_rest, b_slab


if __name__ == "__main__":
    key = jax.random.PRNGKey(0)
    k_x, k_p = jax.random.split(key)
    # (seq, batch, d_model) — PyTorch nn.MultiheadAttention default layout.
    x = jax.random.normal(k_x, (S, B, D), jnp.float32)
    params = init_params(k_p)

    out = transformer_decoder_block(x, params)
    out = jax.block_until_ready(out)
    assert out.shape == (S, B, D)
    assert bool(jnp.all(jnp.isfinite(out)))
    # TODO(synk): nn.Dropout(0.1) is identity here (eval mode); training-mode dropout
    # would use pltpu.prng_seed / pltpu.stateful_bernoulli.
    print("KERNEL_OK")
</pallas_src>

<mosaic_0001>
module attributes {stable_mosaic.version = 11 : i64} {
  func.func @decoder_block_kernel(%arg0: memref<16x32xf32, #tpu.memory_space<vmem>>, %arg1: memref<32x96xf32, #tpu.memory_space<vmem>>, %arg2: memref<96x32xf32, #tpu.memory_space<vmem>>, %arg3: memref<10x32xf32, #tpu.memory_space<vmem>>, %arg4: memref<16x32xf32, #tpu.memory_space<vmem>>) attributes {dimension_semantics = [], scalar_prefetch = 0 : i64, scratch_operands = 0 : i64, tpu.core_type = #tpu.core_type<tc>} {
    %c0 = arith.constant 0 : index
    %c0_0 = arith.constant 0 : index
    %0 = vector.load %arg0[%c0, %c0_0] : memref<16x32xf32, #tpu.memory_space<vmem>>, vector<16x32xf32>
    %c0_1 = arith.constant 0 : index
    %c0_2 = arith.constant 0 : index
    %1 = vector.load %arg3[%c0_1, %c0_2] : memref<10x32xf32, #tpu.memory_space<vmem>>, vector<10x32xf32>
    %c0_3 = arith.constant 0 : index
    %c0_4 = arith.constant 0 : index
    %2 = vector.load %arg1[%c0_3, %c0_4] : memref<32x96xf32, #tpu.memory_space<vmem>>, vector<32x96xf32>
    %cst = arith.constant dense<0.000000e+00> : vector<16x96xf32>
    %3 = tpu.matmul %0, %2, %cst {dimension_numbers = #tpu.dot_dimension_numbers<[1], [0], [0], [1], [0, 0, 1, 1], [], []>} : vector<16x32xf32>, vector<32x96xf32>, vector<16x96xf32> -> vector<16x96xf32>
    %4 = vector.extract_strided_slice %3 {offsets = [0, 0], sizes = [16, 32], strides = [1, 1]} : vector<16x96xf32> to vector<16x32xf32>
    %5 = vector.extract_strided_slice %1 {offsets = [0, 0], sizes = [1, 32], strides = [1, 1]} : vector<10x32xf32> to vector<1x32xf32>
    %6 = vector.broadcast %5 : vector<1x32xf32> to vector<16x32xf32>
    %7 = arith.addf %4, %6 : vector<16x32xf32>
    %8 = vector.extract_strided_slice %3 {offsets = [0, 32], sizes = [16, 32], strides = [1, 1]} : vector<16x96xf32> to vector<16x32xf32>
    %9 = vector.extract_strided_slice %1 {offsets = [1, 0], sizes = [1, 32], strides = [1, 1]} : vector<10x32xf32> to vector<1x32xf32>
    %10 = vector.broadcast %9 : vector<1x32xf32> to vector<16x32xf32>
    %11 = arith.addf %8, %10 : vector<16x32xf32>
    %12 = vector.extract_strided_slice %3 {offsets = [0, 64], sizes = [16, 32], strides = [1, 1]} : vector<16x96xf32> to vector<16x32xf32>
    %13 = vector.extract_strided_slice %1 {offsets = [2, 0], sizes = [1, 32], strides = [1, 1]} : vector<10x32xf32> to vector<1x32xf32>
    %14 = vector.broadcast %13 : vector<1x32xf32> to vector<16x32xf32>
    %15 = arith.addf %12, %14 : vector<16x32xf32>
    %16 = tpu.iota {dimensions = array<i32: 0>} : vector<16x16xi32>
    %17 = tpu.iota {dimensions = array<i32: 1>} : vector<16x16xi32>
    %c2_i32 = arith.constant 2 : i32
    %c0_i32 = arith.constant 0 : i32
    %18 = arith.cmpi eq, %c2_i32, %c0_i32 : i32
    %c1_i32 = arith.constant 1 : i32
    %19 = arith.select %18, %c1_i32, %c2_i32 : i32
    %20 = vector.broadcast %19 : i32 to vector<16x16xi32>
    %21 = arith.remsi %16, %20 : vector<16x16xi32>
    %c0_i32_5 = arith.constant 0 : i32
    %22 = vector.broadcast %c0_i32_5 : i32 to vector<16x16xi32>
    %23 = arith.cmpi ne, %21, %22 : vector<16x16xi32>
    %c0_i32_6 = arith.constant 0 : i32
    %24 = vector.broadcast %c0_i32_6 : i32 to vector<16x16xi32>
    %25 = arith.cmpi slt, %21, %24 : vector<16x16xi32>
    %c0_i32_7 = arith.constant 0 : i32
    %26 = arith.cmpi slt, %19, %c0_i32_7 : i32
    %27 = vector.broadcast %26 : i1 to vector<16x16xi1>
    %28 = vector.broadcast %27 : vector<16x16xi1> to vector<16x16xi1>
    %29 = arith.xori %25, %28 : vector<16x16xi1>
    %30 = arith.andi %29, %23 : vector<16x16xi1>
    %31 = vector.broadcast %19 : i32 to vector<16x16xi32>
    %32 = arith.addi %21, %31 : vector<16x16xi32>
    %33 = arith.select %30, %32, %21 : vector<16x16xi1>, vector<16x16xi32>
    %c2_i32_8 = arith.constant 2 : i32
    %c0_i32_9 = arith.constant 0 : i32
    %34 = arith.cmpi eq, %c2_i32_8, %c0_i32_9 : i32
    %c1_i32_10 = arith.constant 1 : i32
    %35 = arith.select %34, %c1_i32_10, %c2_i32_8 : i32
    %36 = vector.broadcast %35 : i32 to vector<16x16xi32>
    %37 = arith.remsi %17, %36 : vector<16x16xi32>
    %c0_i32_11 = arith.constant 0 : i32
    %38 = vector.broadcast %c0_i32_11 : i32 to vector<16x16xi32>
    %39 = arith.cmpi ne, %37, %38 : vector<16x16xi32>
    %c0_i32_12 = arith.constant 0 : i32
    %40 = vector.broadcast %c0_i32_12 : i32 to vector<16x16xi32>
    %41 = arith.cmpi slt, %37, %40 : vector<16x16xi32>
    %c0_i32_13 = arith.constant 0 : i32
    %42 = arith.cmpi slt, %35, %c0_i32_13 : i32
    %43 = vector.broadcast %42 : i1 to vector<16x16xi1>
    %44 = vector.broadcast %43 : vector<16x16xi1> to vector<16x16xi1>
    %45 = arith.xori %41, %44 : vector<16x16xi1>
    %46 = arith.andi %45, %39 : vector<16x16xi1>
    %47 = vector.broadcast %35 : i32 to vector<16x16xi32>
    %48 = arith.addi %37, %47 : vector<16x16xi32>
    %49 = arith.select %46, %48, %37 : vector<16x16xi1>, vector<16x16xi32>
    %50 = arith.cmpi eq, %33, %49 : vector<16x16xi32>
    %cst_14 = arith.constant 0.000000e+00 : f32
    %cst_15 = arith.constant -1.000000e+30 : f32
    %51 = vector.broadcast %cst_14 : f32 to vector<16x16xf32>
    %52 = vector.broadcast %cst_15 : f32 to vector<16x16xf32>
    %53 = arith.select %50, %51, %52 : vector<16x16xi1>, vector<16x16xf32>
    %54 = vector.extract_strided_slice %7 {offsets = [0, 0], sizes = [16, 8], strides = [1, 1]} : vector<16x32xf32> to vector<16x8xf32>
    %55 = vector.extract_strided_slice %11 {offsets = [0, 0], sizes = [16, 8], strides = [1, 1]} : vector<16x32xf32> to vector<16x8xf32>
    %56 = vector.extract_strided_slice %15 {offsets = [0, 0], sizes = [16, 8], strides = [1, 1]} : vector<16x32xf32> to vector<16x8xf32>
    %cst_16 = arith.constant dense<0.000000e+00> : vector<16x16xf32>
    %57 = tpu.matmul %54, %55, %cst_16 {dimension_numbers = #tpu.dot_dimension_numbers<[1], [1], [0], [0], [0, 0, 1, 0], [], []>} : vector<16x8xf32>, vector<16x8xf32>, vector<16x16xf32> -> vector<16x16xf32>
    %58 = arith.addf %57, %53 : vector<16x16xf32>
    %cst_17 = arith.constant dense<0xFF800000> : vector<16xf32>
    %59 = vector.multi_reduction <maximumf>, %58, %cst_17 [1] : vector<16x16xf32> to vector<16xf32>
    %60 = vector.shape_cast %59 : vector<16xf32> to vector<16x1xf32>
    %61 = vector.broadcast %60 : vector<16x1xf32> to vector<16x16xf32>
    %62 = arith.subf %58, %61 : vector<16x16xf32>
    %63 = math.exp %62 : vector<16x16xf32>
    %cst_18 = arith.constant dense<0.000000e+00> : vector<16xf32>
    %64 = vector.multi_reduction <add>, %63, %cst_18 [1] : vector<16x16xf32> to vector<16xf32>
    %65 = vector.shape_cast %64 : vector<16xf32> to vector<16x1xf32>
    %66 = tpu.reciprocal %65 {approx = true} : vector<16x1xf32> -> vector<16x1xf32>
    %67 = vector.broadcast %66 : vector<16x1xf32> to vector<16x16xf32>
    %68 = arith.mulf %63, %67 : vector<16x16xf32>
    %cst_19 = arith.constant dense<0.000000e+00> : vector<16x8xf32>
    %69 = tpu.matmul %68, %56, %cst_19 {dimension_numbers = #tpu.dot_dimension_numbers<[1], [0], [0], [1], [0, 0, 1, 1], [], []>} : vector<16x16xf32>, vector<16x8xf32>, vector<16x8xf32> -> vector<16x8xf32>
    %70 = vector.extract_strided_slice %7 {offsets = [0, 8], sizes = [16, 8], strides = [1, 1]} : vector<16x32xf32> to vector<16x8xf32>
    %71 = vector.extract_strided_slice %11 {offsets = [0, 8], sizes = [16, 8], strides = [1, 1]} : vector<16x32xf32> to vector<16x8xf32>
    %72 = vector.extract_strided_slice %15 {offsets = [0, 8], sizes = [16, 8], strides = [1, 1]} : vector<16x32xf32> to vector<16x8xf32>
    %cst_20 = arith.constant dense<0.000000e+00> : vector<16x16xf32>
    %73 = tpu.matmul %70, %71, %cst_20 {dimension_numbers = #tpu.dot_dimension_numbers<[1], [1], [0], [0], [0, 0, 1, 0], [], []>} : vector<16x8xf32>, vector<16x8xf32>, vector<16x16xf32> -> vector<16x16xf32>
    %74 = arith.addf %73, %53 : vector<16x16xf32>
    %cst_21 = arith.constant dense<0xFF800000> : vector<16xf32>
    %75 = vector.multi_reduction <maximumf>, %74, %cst_21 [1] : vector<16x16xf32> to vector<16xf32>
    %76 = vector.shape_cast %75 : vector<16xf32> to vector<16x1xf32>
    %77 = vector.broadcast %76 : vector<16x1xf32> to vector<16x16xf32>
    %78 = arith.subf %74, %77 : vector<16x16xf32>
    %79 = math.exp %78 : vector<16x16xf32>
    %cst_22 = arith.constant dense<0.000000e+00> : vector<16xf32>
    %80 = vector.multi_reduction <add>, %79, %cst_22 [1] : vector<16x16xf32> to vector<16xf32>
    %81 = vector.shape_cast %80 : vector<16xf32> to vector<16x1xf32>
    %82 = tpu.reciprocal %81 {approx = true} : vector<16x1xf32> -> vector<16x1xf32>
    %83 = vector.broadcast %82 : vector<16x1xf32> to vector<16x16xf32>
    %84 = arith.mulf %79, %83 : vector<16x16xf32>
    %cst_23 = arith.constant dense<0.000000e+00> : vector<16x8xf32>
    %85 = tpu.matmul %84, %72, %cst_23 {dimension_numbers = #tpu.dot_dimension_numbers<[1], [0], [0], [1], [0, 0, 1, 1], [], []>} : vector<16x16xf32>, vector<16x8xf32>, vector<16x8xf32> -> vector<16x8xf32>
    %86 = vector.extract_strided_slice %7 {offsets = [0, 16], sizes = [16, 8], strides = [1, 1]} : vector<16x32xf32> to vector<16x8xf32>
    %87 = vector.extract_strided_slice %11 {offsets = [0, 16], sizes = [16, 8], strides = [1, 1]} : vector<16x32xf32> to vector<16x8xf32>
    %88 = vector.extract_strided_slice %15 {offsets = [0, 16], sizes = [16, 8], strides = [1, 1]} : vector<16x32xf32> to vector<16x8xf32>
    %cst_24 = arith.constant dense<0.000000e+00> : vector<16x16xf32>
    %89 = tpu.matmul %86, %87, %cst_24 {dimension_numbers = #tpu.dot_dimension_numbers<[1], [1], [0], [0], [0, 0, 1, 0], [], []>} : vector<16x8xf32>, vector<16x8xf32>, vector<16x16xf32> -> vector<16x16xf32>
    %90 = arith.addf %89, %53 : vector<16x16xf32>
    %cst_25 = arith.constant dense<0xFF800000> : vector<16xf32>
    %91 = vector.multi_reduction <maximumf>, %90, %cst_25 [1] : vector<16x16xf32> to vector<16xf32>
    %92 = vector.shape_cast %91 : vector<16xf32> to vector<16x1xf32>
    %93 = vector.broadcast %92 : vector<16x1xf32> to vector<16x16xf32>
    %94 = arith.subf %90, %93 : vector<16x16xf32>
    %95 = math.exp %94 : vector<16x16xf32>
    %cst_26 = arith.constant dense<0.000000e+00> : vector<16xf32>
    %96 = vector.multi_reduction <add>, %95, %cst_26 [1] : vector<16x16xf32> to vector<16xf32>
    %97 = vector.shape_cast %96 : vector<16xf32> to vector<16x1xf32>
    %98 = tpu.reciprocal %97 {approx = true} : vector<16x1xf32> -> vector<16x1xf32>
    %99 = vector.broadcast %98 : vector<16x1xf32> to vector<16x16xf32>
    %100 = arith.mulf %95, %99 : vector<16x16xf32>
    %cst_27 = arith.constant dense<0.000000e+00> : vector<16x8xf32>
    %101 = tpu.matmul %100, %88, %cst_27 {dimension_numbers = #tpu.dot_dimension_numbers<[1], [0], [0], [1], [0, 0, 1, 1], [], []>} : vector<16x16xf32>, vector<16x8xf32>, vector<16x8xf32> -> vector<16x8xf32>
    %102 = vector.extract_strided_slice %7 {offsets = [0, 24], sizes = [16, 8], strides = [1, 1]} : vector<16x32xf32> to vector<16x8xf32>
    %103 = vector.extract_strided_slice %11 {offsets = [0, 24], sizes = [16, 8], strides = [1, 1]} : vector<16x32xf32> to vector<16x8xf32>
    %104 = vector.extract_strided_slice %15 {offsets = [0, 24], sizes = [16, 8], strides = [1, 1]} : vector<16x32xf32> to vector<16x8xf32>
    %cst_28 = arith.constant dense<0.000000e+00> : vector<16x16xf32>
    %105 = tpu.matmul %102, %103, %cst_28 {dimension_numbers = #tpu.dot_dimension_numbers<[1], [1], [0], [0], [0, 0, 1, 0], [], []>} : vector<16x8xf32>, vector<16x8xf32>, vector<16x16xf32> -> vector<16x16xf32>
    %106 = arith.addf %105, %53 : vector<16x16xf32>
    %cst_29 = arith.constant dense<0xFF800000> : vector<16xf32>
    %107 = vector.multi_reduction <maximumf>, %106, %cst_29 [1] : vector<16x16xf32> to vector<16xf32>
    %108 = vector.shape_cast %107 : vector<16xf32> to vector<16x1xf32>
    %109 = vector.broadcast %108 : vector<16x1xf32> to vector<16x16xf32>
    %110 = arith.subf %106, %109 : vector<16x16xf32>
    %111 = math.exp %110 : vector<16x16xf32>
    %cst_30 = arith.constant dense<0.000000e+00> : vector<16xf32>
    %112 = vector.multi_reduction <add>, %111, %cst_30 [1] : vector<16x16xf32> to vector<16xf32>
    %113 = vector.shape_cast %112 : vector<16xf32> to vector<16x1xf32>
    %114 = tpu.reciprocal %113 {approx = true} : vector<16x1xf32> -> vector<16x1xf32>
    %115 = vector.broadcast %114 : vector<16x1xf32> to vector<16x16xf32>
    %116 = arith.mulf %111, %115 : vector<16x16xf32>
    %cst_31 = arith.constant dense<0.000000e+00> : vector<16x8xf32>
    %117 = tpu.matmul %116, %104, %cst_31 {dimension_numbers = #tpu.dot_dimension_numbers<[1], [0], [0], [1], [0, 0, 1, 1], [], []>} : vector<16x16xf32>, vector<16x8xf32>, vector<16x8xf32> -> vector<16x8xf32>
    %118 = tpu.concatenate %69, %85, %101, %117 in 1 : vector<16x8xf32>, vector<16x8xf32>, vector<16x8xf32>, vector<16x8xf32> -> vector<16x32xf32>
    %c0_32 = arith.constant 0 : index
    %c0_33 = arith.constant 0 : index
    %119 = vector.load %arg2[%c0_32, %c0_33] : memref<96x32xf32, #tpu.memory_space<vmem>>, vector<32x32xf32>
    %cst_34 = arith.constant dense<0.000000e+00> : vector<16x32xf32>
    %120 = tpu.matmul %118, %119, %cst_34 {dimension_numbers = #tpu.dot_dimension_numbers<[1], [0], [0], [1], [0, 0, 1, 1], [], []>} : vector<16x32xf32>, vector<32x32xf32>, vector<16x32xf32> -> vector<16x32xf32>
    %121 = vector.extract_strided_slice %1 {offsets = [3, 0], sizes = [1, 32], strides = [1, 1]} : vector<10x32xf32> to vector<1x32xf32>
    %122 = vector.broadcast %121 : vector<1x32xf32> to vector<16x32xf32>
    %123 = arith.addf %120, %122 : vector<16x32xf32>
    %124 = arith.addf %0, %123 : vector<16x32xf32>
    %125 = vector.extract_strided_slice %1 {offsets = [4, 0], sizes = [1, 32], strides = [1, 1]} : vector<10x32xf32> to vector<1x32xf32>
    %126 = vector.extract_strided_slice %1 {offsets = [5, 0], sizes = [1, 32], strides = [1, 1]} : vector<10x32xf32> to vector<1x32xf32>
    %cst_35 = arith.constant dense<0.000000e+00> : vector<16xf32>
    %127 = vector.multi_reduction <add>, %124, %cst_35 [1] : vector<16x32xf32> to vector<16xf32>
    %128 = vector.shape_cast %127 : vector<16xf32> to vector<16x1xf32>
    %cst_36 = arith.constant 3.200000e+01 : f32
    %129 = vector.broadcast %cst_36 : f32 to vector<16x1xf32>
    %130 = arith.divf %128, %129 : vector<16x1xf32>
    %131 = vector.broadcast %130 : vector<16x1xf32> to vector<16x32xf32>
    %132 = arith.subf %124, %131 : vector<16x32xf32>
    %133 = arith.mulf %132, %132 : vector<16x32xf32>
    %cst_37 = arith.constant dense<0.000000e+00> : vector<16xf32>
    %134 = vector.multi_reduction <add>, %133, %cst_37 [1] : vector<16x32xf32> to vector<16xf32>
    %135 = vector.shape_cast %134 : vector<16xf32> to vector<16x1xf32>
    %cst_38 = arith.constant 3.200000e+01 : f32
    %136 = vector.broadcast %cst_38 : f32 to vector<16x1xf32>
    %137 = arith.divf %135, %136 : vector<16x1xf32>
    %cst_39 = arith.constant 9.99999974E-6 : f32
    %138 = vector.broadcast %cst_39 : f32 to vector<16x1xf32>
    %139 = arith.addf %137, %138 : vector<16x1xf32>
    %140 = math.rsqrt %139 : vector<16x1xf32>
    %141 = vector.broadcast %140 : vector<16x1xf32> to vector<16x32xf32>
    %142 = arith.mulf %132, %141 : vector<16x32xf32>
    %143 = vector.broadcast %125 : vector<1x32xf32> to vector<16x32xf32>
    %144 = arith.mulf %142, %143 : vector<16x32xf32>
    %145 = vector.broadcast %126 : vector<1x32xf32> to vector<16x32xf32>
    %146 = arith.addf %144, %145 : vector<16x32xf32>
    %c32 = arith.constant 32 : index
    %c0_40 = arith.constant 0 : index
    %147 = vector.load %arg2[%c32, %c0_40] : memref<96x32xf32, #tpu.memory_space<vmem>>, vector<32x32xf32>
    %cst_41 = arith.constant dense<0.000000e+00> : vector<16x32xf32>
    %148 = tpu.matmul %146, %147, %cst_41 {dimension_numbers = #tpu.dot_dimension_numbers<[1], [0], [0], [1], [0, 0, 1, 1], [], []>} : vector<16x32xf32>, vector<32x32xf32>, vector<16x32xf32> -> vector<16x32xf32>
    %149 = vector.extract_strided_slice %1 {offsets = [6, 0], sizes = [1, 32], strides = [1, 1]} : vector<10x32xf32> to vector<1x32xf32>
    %150 = vector.broadcast %149 : vector<1x32xf32> to vector<16x32xf32>
    %151 = arith.addf %148, %150 : vector<16x32xf32>
    %cst_42 = arith.constant 0.000000e+00 : f32
    %152 = vector.broadcast %cst_42 : f32 to vector<16x32xf32>
    %153 = arith.maximumf %151, %152 : vector<16x32xf32>
    %c64 = arith.constant 64 : index
    %c0_43 = arith.constant 0 : index
    %154 = vector.load %arg2[%c64, %c0_43] : memref<96x32xf32, #tpu.memory_space<vmem>>, vector<32x32xf32>
    %cst_44 = arith.constant dense<0.000000e+00> : vector<16x32xf32>
    %155 = tpu.matmul %153, %154, %cst_44 {dimension_numbers = #tpu.dot_dimension_numbers<[1], [0], [0], [1], [0, 0, 1, 1], [], []>} : vector<16x32xf32>, vector<32x32xf32>, vector<16x32xf32> -> vector<16x32xf32>
    %156 = vector.extract_strided_slice %1 {offsets = [7, 0], sizes = [1, 32], strides = [1, 1]} : vector<10x32xf32> to vector<1x32xf32>
    %157 = vector.broadcast %156 : vector<1x32xf32> to vector<16x32xf32>
    %158 = arith.addf %155, %157 : vector<16x32xf32>
    %159 = arith.addf %146, %158 : vector<16x32xf32>
    %160 = vector.extract_strided_slice %1 {offsets = [8, 0], sizes = [1, 32], strides = [1, 1]} : vector<10x32xf32> to vector<1x32xf32>
    %161 = vector.extract_strided_slice %1 {offsets = [9, 0], sizes = [1, 32], strides = [1, 1]} : vector<10x32xf32> to vector<1x32xf32>
    %cst_45 = arith.constant dense<0.000000e+00> : vector<16xf32>
    %162 = vector.multi_reduction <add>, %159, %cst_45 [1] : vector<16x32xf32> to vector<16xf32>
    %163 = vector.shape_cast %162 : vector<16xf32> to vector<16x1xf32>
    %cst_46 = arith.constant 3.200000e+01 : f32
    %164 = vector.broadcast %cst_46 : f32 to vector<16x1xf32>
    %165 = arith.divf %163, %164 : vector<16x1xf32>
    %166 = vector.broadcast %165 : vector<16x1xf32> to vector<16x32xf32>
    %167 = arith.subf %159, %166 : vector<16x32xf32>
    %168 = arith.mulf %167, %167 : vector<16x32xf32>
    %cst_47 = arith.constant dense<0.000000e+00> : vector<16xf32>
    %169 = vector.multi_reduction <add>, %168, %cst_47 [1] : vector<16x32xf32> to vector<16xf32>
    %170 = vector.shape_cast %169 : vector<16xf32> to vector<16x1xf32>
    %cst_48 = arith.constant 3.200000e+01 : f32
    %171 = vector.broadcast %cst_48 : f32 to vector<16x1xf32>
    %172 = arith.divf %170, %171 : vector<16x1xf32>
    %cst_49 = arith.constant 9.99999974E-6 : f32
    %173 = vector.broadcast %cst_49 : f32 to vector<16x1xf32>
    %174 = arith.addf %172, %173 : vector<16x1xf32>
    %175 = math.rsqrt %174 : vector<16x1xf32>
    %176 = vector.broadcast %175 : vector<16x1xf32> to vector<16x32xf32>
    %177 = arith.mulf %167, %176 : vector<16x32xf32>
    %178 = vector.broadcast %160 : vector<1x32xf32> to vector<16x32xf32>
    %179 = arith.mulf %177, %178 : vector<16x32xf32>
    %180 = vector.broadcast %161 : vector<1x32xf32> to vector<16x32xf32>
    %181 = arith.addf %179, %180 : vector<16x32xf32>
    %c0_50 = arith.constant 0 : index
    %c0_51 = arith.constant 0 : index
    %182 = vector.load %arg4[%c0_50, %c0_51] : memref<16x32xf32, #tpu.memory_space<vmem>>, vector<16x32xf32>
    tpu.vector_store %arg4[%c0_50, %c0_51], %181 {strides = array<i32>} : memref<16x32xf32, #tpu.memory_space<vmem>>, vector<16x32xf32>,
    return
  }
}

</mosaic_0001>

<llo_original>
// kernel: tpu_custom_call.1
$region0: #{tpu_custom_call.1}
  #allocation0 [shape = 'u32[]', space=smem, size = 0x4, offset = 0x4, fixed_abs, tag = 'smem constant byte address 0x4 - core index']
  #allocation1 [shape = 'u32[144,128]{1,0:T(1,128)}', space=vmem, size = 0x12000, scoped, tag = 'internal scratch']
  %s0 = inlined_call_operand.vmem [shape: f32[16,32], index: 0, kind: input, shape index: {}]
  %s1 = inlined_call_operand.vmem [shape: f32[32,96], index: 1, kind: input, shape index: {}]
  %s2 = inlined_call_operand.vmem [shape: f32[96,32], index: 2, kind: input, shape index: {}]
  %s3 = inlined_call_operand.vmem [shape: f32[10,32], index: 3, kind: input, shape index: {}]
  %s4 = inlined_call_operand.hbm [shape: f32[16,32], index: 4, kind: output, shape index: {}]
  %s5 = sld [smem:[#allocation0]]
  $region26: #{tpu_custom_call.1} parent=0
    _
  %s7 = ssub.s32 1, %s5
  %s8 = scalar_select 0, %s7, %s5
  $region1: #{tpu_custom_call.1} parent=0
    #allocation2 [shape = 'u8[8192]{0}', space=vmem, size = 0x2000, scoped, tag = 'output window, operand 0, single buffered']
    #allocation3 [shape = 's32[1]{0}', space=sflag, size = 0x4, scoped, tag = 'scoped memory for tpu_custom_call.1']
    %9 = vsyncpa [#allocation3], 0
    // Predicated region
    $region2: #{tpu_custom_call.1} parent=1 // pred_check
      _
    $region3: #{tpu_custom_call.1} parent=1 // pred_check_branch
      %11 = sbr.rel (0) target = $region5
    $region4: #{tpu_custom_call.1} parent=1 // pred_region
      _
    $region5: #{tpu_custom_call.1} parent=1 // pred_fallthru
      _
    // Predicated region
    $region6: #{tpu_custom_call.1} parent=1 // pred_check
      _
    $region7: #{tpu_custom_call.1} parent=1 // pred_check_branch
      %13 = sbr.rel (0) target = $region9
    $region8: #{tpu_custom_call.1} parent=1 // pred_region
      _
    $region9: #{tpu_custom_call.1} parent=1 // pred_fallthru
      _
    // Predicated region
    $region10: #{tpu_custom_call.1} parent=1 // pred_check
      _
    $region11: #{tpu_custom_call.1} parent=1 // pred_check_branch
      %15 = sbr.rel (0) target = $region13
    $region12: #{tpu_custom_call.1} parent=1 // pred_region
      _
    $region13: #{tpu_custom_call.1} parent=1 // pred_fallthru
      _
    // Predicated region
    $region14: #{tpu_custom_call.1} parent=1 // pred_check
      _
    $region15: #{tpu_custom_call.1} parent=1 // pred_check_branch
      %17 = sbr.rel (0) target = $region17
    $region16: #{tpu_custom_call.1} parent=1 // pred_region
      _
    $region17: #{tpu_custom_call.1} parent=1 // pred_fallthru
      _
    %v18 = vld [vmem:[%s0] sm:$0xff]
    %v19 = vld [vmem:[%s0 + $0x8] sm:$0xff]
    %v20 = vld [vmem:[%s3] sm:$0xff]
    %v21 = vld [vmem:[%s3 + $0x8] sm:$0x3]
    %v22 = vld [vmem:[%s1] sm:$0xff]
    %v23 = vld [vmem:[%s1 + $0x8] sm:$0xff]
    %v24 = vld [vmem:[%s1 + $0x10] sm:$0xff]
    %v25 = vld [vmem:[%s1 + $0x18] sm:$0xff]
    %vm26 = vcmask 261120
    %v28 = vsel %vm26, %v18, 0
    %v31 = vsel %vm26, %v19, 0
    %33 = vmatprep.subr.mxu0 0.0
    %34 = vmatpush1.msra.mxu0 %v22
    %35 = vmatprep.subr.mxu0 0.0
    %36 = vmatpush1.msra.mxu0 %v23
    %37 = vmatprep.subr.mxu0 0.0
    %38 = vmatpush1.msra.mxu0 %v24
    %39 = vmatprep.subr.mxu0 0.0
    %40 = vmatpush1.msra.mxu0 %v25
    %41 = vmatprep.subr.mxu0 0.0
    %42 = vmatpush1.msra.mxu0 0.0
    %43 = vmatprep.subr.mxu0 0.0
    %44 = vmatpush1.msra.mxu0 0.0
    %45 = vmatprep.subr.mxu0 0.0
    %46 = vmatpush1.msra.mxu0 0.0
    %47 = vmatprep.subr.mxu0 0.0
    %48 = vmatpush1.msra.mxu0 0.0
    %49 = vmatprep.subr.mxu0 0.0
    %50 = vmatpush1.msra.mxu0 0.0
    %51 = vmatprep.subr.mxu0 0.0
    %52 = vmatpush1.msra.mxu0 0.0
    %53 = vmatprep.subr.mxu0 0.0
    %54 = vmatpush1.msra.mxu0 0.0
    %55 = vmatprep.subr.mxu0 0.0
    %56 = vmatpush1.msra.mxu0 0.0
    %57 = vmatprep.subr.mxu0 0.0
    %58 = vmatpush1.msra.mxu0 0.0
    %59 = vmatprep.subr.mxu0 0.0
    %60 = vmatpush1.msra.mxu0 0.0
    %61 = vmatprep.subr.mxu0 0.0
    %62 = vmatpush1.msra.mxu0 0.0
    %63 = vmatprep.subr.mxu0 0.0
    %64 = vmatpush1.msra.mxu0 0.0
    %65 = vmatprep.subr.mxu0 0.0
    %66 = vmatpush1.msra.mxu0 0.0
    %67 = vmatprep.subr.mxu0 0.0
    %68 = vmatpush1.msra.mxu0 0.0
    %69 = vmatprep.subr.mxu0 0.0
    %70 = vmatpush1.msra.mxu0 0.0
    %71 = vmatprep.subr.mxu0 0.0
    %72 = vmatpush1.msra.mxu0 0.0
    %73 = vmatprep.subr.mxu0 0.0
    %74 = vmatpush1.msra.mxu0 0.0
    %75 = vmatprep.subr.mxu0 0.0
    %76 = vmatpush1.msra.mxu0 0.0
    %77 = vmatprep.subr.mxu0 0.0
    %78 = vmatpush1.msra.mxu0 0.0
    %79 = vmatprep.subr.mxu0 0.0
    %80 = vmatpush1.msra.mxu0 0.0
    %81 = vmatprep.subr.mxu0 0.0
    %82 = vmatpush1.msra.mxu0 0.0
    %83 = vmatprep.subr.mxu0 0.0
    %84 = vmatpush1.msra.mxu0 0.0
    %85 = vmatprep.subr.mxu0 0.0
    %86 = vmatpush1.msra.mxu0 0.0
    %87 = vmatprep.subr.mxu0 0.0
    %88 = vmatpush1.msra.mxu0 0.0
    %89 = vmatprep.subr.mxu0 0.0
    %90 = vmatpush1.msra.mxu0 0.0
    %91 = vmatprep.subr.mxu0 0.0
    %92 = vmatpush1.msra.mxu0 0.0
    %93 = vmatprep.subr.mxu0 0.0
    %94 = vmatpush1.msra.mxu0 0.0
    %95 = vmatprep.subr.mxu0 0.0
    %96 = vmatpush1.msra.mxu0 0.0
    %97 = vmatprep.mubr.f32.mxu0 0.0
    %98 = vmatmul.mubr.f32.gmra.mrb[0].mxu0 %v28
    %v99 = vpop.f32.mrb[0].mxu0
    %v100 = vadd.f32 0.0, %v99
    %v101 = vpop.f32.mrb[0].mxu0
    %102 = vmatprep.mubr.f32.mxu0 0.0
    %103 = vmatmul.mubr.f32.gmra.mrb[0].mxu0 %v31
    %v104 = vpop.f32.mrb[0].mxu0
    %v105 = vadd.f32 0.0, %v104
    %v106 = vpop.f32.mrb[0].mxu0
    %107 = vdwg.mxu0
    %v108 = vlaneseq
    %v109 = vshrl.u32 %v108, 7
    %v110 = vsub.s32 0, %v109
    %v111 = vrot.slane %v20, %v110
    %v112 = vadd.f32 %v100, %v111
    %v113 = vadd.f32 %v105, %v111
    %v114 = vlaneseq
    %v115 = vshrl.u32 %v114, 7
    %v116 = vsub.s32 1, %v115
    %v117 = vrot.slane %v20, %v116
    %119 = vrot.lane.b32.xlu0 %v117, 32
    %v120 = vpop.permute.xlu0 %119
    %v122 = vadd.f32 %v100, %v120
    %v123 = vadd.f32 %v105, %v120
    %v124 = vlaneseq
    %v125 = vshrl.u32 %v124, 7
    %v126 = vsub.s32 2, %v125
    %v127 = vrot.slane %v20, %v126
    %129 = vrot.lane.b32.xlu0 %v127, 64
    %v130 = vpop.permute.xlu0 %129
    %v132 = vadd.f32 %v100, %v130
    %v133 = vadd.f32 %v105, %v130
    %v134 = vlaneseq
    %v135 = vshrl.u32 %v134, 7
    %v136 = vadd.s32 %v135, 8
    %v137 = vlaneseq
    %v138 = vand.u32 %v137, 127
    %vm139 = vcmp.lt.s32.totalorder %v135, 0
    %v140 = vsub.s32 0, %v135
    %v141 = vsel %vm139, %v140, %v135
    %v142 = vshrl.u32 %v141, 1
    %v143 = vand.u32 %v141, 1
    %v144 = vsub.s32 0, %v143
    %v145 = vsel %vm139, %v144, %v143
    %vm146 = vcmp.lt.s32.totalorder %v136, 0
    %v147 = vsub.s32 0, %v136
    %v148 = vsel %vm146, %v147, %v136
    %v149 = vshrl.u32 %v148, 1
    %v150 = vand.u32 %v148, 1
    %v151 = vsub.s32 0, %v150
    %v152 = vsel %vm146, %v151, %v150
    %vm153 = vcmp.ne.s32.totalorder %v145, 0
    %vm154 = vcmp.ne.s32.totalorder %v152, 0
    %vm155 = vcmp.lt.s32.totalorder %v145, 0
    %vm156 = vcmp.lt.s32.totalorder %v152, 0
    %vm157 = vmand %vm155, %vm153
    %vm158 = vmand %vm156, %vm154
    %v159 = vadd.s32 %v145, 2
    %v160 = vadd.s32 %v152, 2
    %v161 = vsel %vm157, %v159, %v145
    %v162 = vsel %vm158, %v160, %v152
    %vm163 = vcmp.lt.s32.totalorder %v138, 0
    %v164 = vsub.s32 0, %v138
    %v165 = vsel %vm163, %v164, %v138
    %v166 = vshrl.u32 %v165, 1
    %v167 = vand.u32 %v165, 1
    %v168 = vsub.s32 0, %v167
    %v169 = vsel %vm163, %v168, %v167
    %vm170 = vcmp.ne.s32.totalorder %v169, 0
    %vm171 = vcmp.lt.s32.totalorder %v169, 0
    %vm172 = vmand %vm171, %vm170
    %v173 = vadd.s32 %v169, 2
    %v174 = vsel %vm172, %v173, %v169
    %vm175 = vcmp.eq.s32.totalorder %v161, %v174
    %vm176 = vcmp.eq.s32.totalorder %v162, %v174
    %v177 = vsel %vm175, 0.0, -1e+30
    %v178 = vsel %vm176, 0.0, -1e+30
    %181 = vrot.lane.b32.xlu0 %v122, 96
    %v182 = vpop.permute.xlu0 %181
    %183 = vrot.lane.b32.xlu0 %v123, 96
    %v184 = vpop.permute.xlu0 %183
    %vm185 = vcmask 64512
    %v187 = vsel %vm185, %v112, 0
    %v190 = vsel %vm185, %v113, 0
    %v192 = vsel %vm185, %v182, 0
    %v194 = vsel %vm185, %v184, 0
    %196 = vmatprep.subr.mxu0 0.0
    %197 = vmatpush1.xpose.msra.mxu0 %v192
    %198 = vmatprep.subr.mxu0 0.0
    %199 = vmatpush1.xpose.msra.mxu0 %v194
    %200 = vmatprep.subr.mxu0 0.0
    %201 = vmatpush1.xpose.msra.mxu0 0.0
    %202 = vmatprep.subr.mxu0 0.0
    %203 = vmatpush1.xpose.msra.mxu0 0.0
    %204 = vmatprep.subr.mxu0 0.0
    %205 = vmatpush1.xpose.msra.mxu0 0.0
    %206 = vmatprep.subr.mxu0 0.0
    %207 = vmatpush1.xpose.msra.mxu0 0.0
    %208 = vmatprep.subr.mxu0 0.0
    %209 = vmatpush1.xpose.msra.mxu0 0.0
    %210 = vmatprep.subr.mxu0 0.0
    %211 = vmatpush1.xpose.msra.mxu0 0.0
    %212 = vmatprep.subr.mxu0 0.0
    %213 = vmatpush1.xpose.msra.mxu0 0.0
    %214 = vmatprep.subr.mxu0 0.0
    %215 = vmatpush1.xpose.msra.mxu0 0.0
    %216 = vmatprep.subr.mxu0 0.0
    %217 = vmatpush1.xpose.msra.mxu0 0.0
    %218 = vmatprep.subr.mxu0 0.0
    %219 = vmatpush1.xpose.msra.mxu0 0.0
    %220 = vmatprep.subr.mxu0 0.0
    %221 = vmatpush1.xpose.msra.mxu0 0.0
    %222 = vmatprep.subr.mxu0 0.0
    %223 = vmatpush1.xpose.msra.mxu0 0.0
    %224 = vmatprep.subr.mxu0 0.0
    %225 = vmatpush1.xpose.msra.mxu0 0.0
    %226 = vmatprep.subr.mxu0 0.0
    %227 = vmatpush1.xpose.msra.mxu0 0.0
    %228 = vmatprep.subr.mxu0 0.0
    %229 = vmatpush1.xpose.msra.mxu0 0.0
    %230 = vmatprep.subr.mxu0 0.0
    %231 = vmatpush1.xpose.msra.mxu0 0.0
    %232 = vmatprep.subr.mxu0 0.0
    %233 = vmatpush1.xpose.msra.mxu0 0.0
    %234 = vmatprep.subr.mxu0 0.0
    %235 = vmatpush1.xpose.msra.mxu0 0.0
    %236 = vmatprep.subr.mxu0 0.0
    %237 = vmatpush1.xpose.msra.mxu0 0.0
    %238 = vmatprep.subr.mxu0 0.0
    %239 = vmatpush1.xpose.msra.mxu0 0.0
    %240 = vmatprep.subr.mxu0 0.0
    %241 = vmatpush1.xpose.msra.mxu0 0.0
    %242 = vmatprep.subr.mxu0 0.0
    %243 = vmatpush1.xpose.msra.mxu0 0.0
    %244 = vmatprep.subr.mxu0 0.0
    %245 = vmatpush1.xpose.msra.mxu0 0.0
    %246 = vmatprep.subr.mxu0 0.0
    %247 = vmatpush1.xpose.msra.mxu0 0.0
    %248 = vmatprep.subr.mxu0 0.0
    %249 = vmatpush1.xpose.msra.mxu0 0.0
    %250 = vmatprep.subr.mxu0 0.0
    %251 = vmatpush1.xpose.msra.mxu0 0.0
    %252 = vmatprep.subr.mxu0 0.0
    %253 = vmatpush1.xpose.msra.mxu0 0.0
    %254 = vmatprep.subr.mxu0 0.0
    %255 = vmatpush1.xpose.msra.mxu0 0.0
    %256 = vmatprep.subr.mxu0 0.0
    %257 = vmatpush1.xpose.msra.mxu0 0.0
    %258 = vmatprep.subr.mxu0 0.0
    %259 = vmatpush1.xpose.msra.mxu0 0.0
    %260 = vmatprep.mubr.f32.mxu0 0.0
    %261 = vmatmul.mubr.f32.gmra.mrb[0].mxu0 %v187
    %v262 = vpop.f32.mrb[0].mxu0
    %v263 = vadd.f32 %v177, %v262
    %v264 = vpop.f32.mrb[0].mxu0
    %265 = vmatprep.mubr.f32.mxu0 0.0
    %266 = vmatmul.mubr.f32.gmra.mrb[0].mxu0 %v190
    %v267 = vpop.f32.mrb[0].mxu0
    %v268 = vadd.f32 %v178, %v267
    %v269 = vpop.f32.mrb[0].mxu0
    %270 = vdwg.mxu0
    %vm271 = vcmask 130048
    %v272 = vsel %vm271, %v263, -inf
    %273 = vmax.xlane.f32.xlu0 %v272
    %v274 = vpop.xlane.xlu0 %273
    %v275 = vsel %vm271, %v268, -inf
    %276 = vmax.xlane.f32.xlu0 %v275
    %v277 = vpop.xlane.xlu0 %276
    %v278 = vsub.f32 %v263, %v274
    %v279 = vsub.f32 %v268, %v277
    %v280 = vmul.f32 %v278, 1.442695
    %v281 = vpow.pop %v280
    %v282 = vmul.f32 %v279, 1.442695
    %v283 = vpow.pop %v282
    %v284 = vsel %vm271, %v281, 0.0
    %285 = vadd.xlane.f32.xlu0 %v284
    %v286 = vpop.xlane.xlu0 %285
    %v287 = vsel %vm271, %v283, 0.0
    %288 = vadd.xlane.f32.xlu0 %v287
    %v289 = vpop.xlane.xlu0 %288
    %v290 = vrcp.pop %v286
    %v291 = vrcp.pop %v289
    %v292 = vmul.f32 %v281, %v290
    %v293 = vmul.f32 %v283, %v291
    %296 = vrot.lane.b32.xlu0 %v132, 64
    %v297 = vpop.permute.xlu0 %296
    %298 = vrot.lane.b32.xlu0 %v133, 64
    %v299 = vpop.permute.xlu0 %298
    %v303 = vsel %vm271, %v292, 0
    %v306 = vsel %vm271, %v293, 0
    %308 = vmatprep.subr.mxu0 0.0
    %309 = vmatpush1.msra.mxu0 %v297
    %310 = vmatprep.subr.mxu0 0.0
    %311 = vmatpush1.msra.mxu0 %v299
    %312 = vmatprep.subr.mxu0 0.0
    %313 = vmatpush1.msra.mxu0 0.0
    %314 = vmatprep.subr.mxu0 0.0
    %315 = vmatpush1.msra.mxu0 0.0
    %316 = vmatprep.subr.mxu0 0.0
    %317 = vmatpush1.msra.mxu0 0.0
    %318 = vmatprep.subr.mxu0 0.0
    %319 = vmatpush1.msra.mxu0 0.0
    %320 = vmatprep.subr.mxu0 0.0
    %321 = vmatpush1.msra.mxu0 0.0
    %322 = vmatprep.subr.mxu0 0.0
    %323 = vmatpush1.msra.mxu0 0.0
    %324 = vmatprep.subr.mxu0 0.0
    %325 = vmatpush1.msra.mxu0 0.0
    %326 = vmatprep.subr.mxu0 0.0
    %327 = vmatpush1.msra.mxu0 0.0
    %328 = vmatprep.subr.mxu0 0.0
    %329 = vmatpush1.msra.mxu0 0.0
    %330 = vmatprep.subr.mxu0 0.0
    %331 = vmatpush1.msra.mxu0 0.0
    %332 = vmatprep.subr.mxu0 0.0
    %333 = vmatpush1.msra.mxu0 0.0
    %334 = vmatprep.subr.mxu0 0.0
    %335 = vmatpush1.msra.mxu0 0.0
    %336 = vmatprep.subr.mxu0 0.0
    %337 = vmatpush1.msra.mxu0 0.0
    %338 = vmatprep.subr.mxu0 0.0
    %339 = vmatpush1.msra.mxu0 0.0
    %340 = vmatprep.subr.mxu0 0.0
    %341 = vmatpush1.msra.mxu0 0.0
    %342 = vmatprep.subr.mxu0 0.0
    %343 = vmatpush1.msra.mxu0 0.0
    %344 = vmatprep.subr.mxu0 0.0
    %345 = vmatpush1.msra.mxu0 0.0
    %346 = vmatprep.subr.mxu0 0.0
    %347 = vmatpush1.msra.mxu0 0.0
    %348 = vmatprep.subr.mxu0 0.0
    %349 = vmatpush1.msra.mxu0 0.0
    %350 = vmatprep.subr.mxu0 0.0
    %351 = vmatpush1.msra.mxu0 0.0
    %352 = vmatprep.subr.mxu0 0.0
    %353 = vmatpush1.msra.mxu0 0.0
    %354 = vmatprep.subr.mxu0 0.0
    %355 = vmatpush1.msra.mxu0 0.0
    %356 = vmatprep.subr.mxu0 0.0
    %357 = vmatpush1.msra.mxu0 0.0
    %358 = vmatprep.subr.mxu0 0.0
    %359 = vmatpush1.msra.mxu0 0.0
    %360 = vmatprep.subr.mxu0 0.0
    %361 = vmatpush1.msra.mxu0 0.0
    %362 = vmatprep.subr.mxu0 0.0
    %363 = vmatpush1.msra.mxu0 0.0
    %364 = vmatprep.subr.mxu0 0.0
    %365 = vmatpush1.msra.mxu0 0.0
    %366 = vmatprep.subr.mxu0 0.0
    %367 = vmatpush1.msra.mxu0 0.0
    %368 = vmatprep.subr.mxu0 0.0
    %369 = vmatpush1.msra.mxu0 0.0
    %370 = vmatprep.subr.mxu0 0.0
    %371 = vmatpush1.msra.mxu0 0.0
    %372 = vmatprep.mubr.f32.mxu0 0.0
    %373 = vmatmul.mubr.f32.gmra.mrb[0].mxu0 %v303
    %v374 = vpop.f32.mrb[0].mxu0
    %v375 = vadd.f32 0.0, %v374
    %v376 = vpop.f32.mrb[0].mxu0
    %377 = vmatprep.mubr.f32.mxu0 0.0
    %378 = vmatmul.mubr.f32.gmra.mrb[0].mxu0 %v306
    %v379 = vpop.f32.mrb[0].mxu0
    %v380 = vadd.f32 0.0, %v379
    %v381 = vpop.f32.mrb[0].mxu0
    %382 = vdwg.mxu0
    %383 = vrot.lane.b32.xlu0 %v112, 120
    %v384 = vpop.permute.xlu0 %383
    %385 = vrot.lane.b32.xlu0 %v113, 120
    %v386 = vpop.permute.xlu0 %385
    %387 = vrot.lane.b32.xlu0 %v122, 88
    %v388 = vpop.permute.xlu0 %387
    %389 = vrot.lane.b32.xlu0 %v123, 88
    %v390 = vpop.permute.xlu0 %389
    %v391 = vsel %vm185, %v384, 0
    %v393 = vsel %vm185, %v386, 0
    %v395 = vsel %vm185, %v388, 0
    %v397 = vsel %vm185, %v390, 0
    %399 = vmatprep.subr.mxu0 0.0
    %400 = vmatpush1.xpose.msra.mxu0 %v395
    %401 = vmatprep.subr.mxu0 0.0
    %402 = vmatpush1.xpose.msra.mxu0 %v397
    %403 = vmatprep.subr.mxu0 0.0
    %404 = vmatpush1.xpose.msra.mxu0 0.0
    %405 = vmatprep.subr.mxu0 0.0
    %406 = vmatpush1.xpose.msra.mxu0 0.0
    %407 = vmatprep.subr.mxu0 0.0
    %408 = vmatpush1.xpose.msra.mxu0 0.0
    %409 = vmatprep.subr.mxu0 0.0
    %410 = vmatpush1.xpose.msra.mxu0 0.0
    %411 = vmatprep.subr.mxu0 0.0
    %412 = vmatpush1.xpose.msra.mxu0 0.0
    %413 = vmatprep.subr.mxu0 0.0
    %414 = vmatpush1.xpose.msra.mxu0 0.0
    %415 = vmatprep.subr.mxu0 0.0
    %416 = vmatpush1.xpose.msra.mxu0 0.0
    %417 = vmatprep.subr.mxu0 0.0
    %418 = vmatpush1.xpose.msra.mxu0 0.0
    %419 = vmatprep.subr.mxu0 0.0
    %420 = vmatpush1.xpose.msra.mxu0 0.0
    %421 = vmatprep.subr.mxu0 0.0
    %422 = vmatpush1.xpose.msra.mxu0 0.0
    %423 = vmatprep.subr.mxu0 0.0
    %424 = vmatpush1.xpose.msra.mxu0 0.0
    %425 = vmatprep.subr.mxu0 0.0
    %426 = vmatpush1.xpose.msra.mxu0 0.0
    %427 = vmatprep.subr.mxu0 0.0
    %428 = vmatpush1.xpose.msra.mxu0 0.0
    %429 = vmatprep.subr.mxu0 0.0
    %430 = vmatpush1.xpose.msra.mxu0 0.0
    %431 = vmatprep.subr.mxu0 0.0
    %432 = vmatpush1.xpose.msra.mxu0 0.0
    %433 = vmatprep.subr.mxu0 0.0
    %434 = vmatpush1.xpose.msra.mxu0 0.0
    %435 = vmatprep.subr.mxu0 0.0
    %436 = vmatpush1.xpose.msra.mxu0 0.0
    %437 = vmatprep.subr.mxu0 0.0
    %438 = vmatpush1.xpose.msra.mxu0 0.0
    %439 = vmatprep.subr.mxu0 0.0
    %440 = vmatpush1.xpose.msra.mxu0 0.0
    %441 = vmatprep.subr.mxu0 0.0
    %442 = vmatpush1.xpose.msra.mxu0 0.0
    %443 = vmatprep.subr.mxu0 0.0
    %444 = vmatpush1.xpose.msra.mxu0 0.0
    %445 = vmatprep.subr.mxu0 0.0
    %446 = vmatpush1.xpose.msra.mxu0 0.0
    %447 = vmatprep.subr.mxu0 0.0
    %448 = vmatpush1.xpose.msra.mxu0 0.0
    %449 = vmatprep.subr.mxu0 0.0
    %450 = vmatpush1.xpose.msra.mxu0 0.0
    %451 = vmatprep.subr.mxu0 0.0
    %452 = vmatpush1.xpose.msra.mxu0 0.0
    %453 = vmatprep.subr.mxu0 0.0
    %454 = vmatpush1.xpose.msra.mxu0 0.0
    %455 = vmatprep.subr.mxu0 0.0
    %456 = vmatpush1.xpose.msra.mxu0 0.0
    %457 = vmatprep.subr.mxu0 0.0
    %458 = vmatpush1.xpose.msra.mxu0 0.0
    %459 = vmatprep.subr.mxu0 0.0
    %460 = vmatpush1.xpose.msra.mxu0 0.0
    %461 = vmatprep.subr.mxu0 0.0
    %462 = vmatpush1.xpose.msra.mxu0 0.0
    %463 = vmatprep.mubr.f32.mxu0 0.0
    %464 = vmatmul.mubr.f32.gmra.mrb[0].mxu0 %v391
    %v465 = vpop.f32.mrb[0].mxu0
    %v466 = vadd.f32 %v177, %v465
    %v467 = vpop.f32.mrb[0].mxu0
    %468 = vmatprep.mubr.f32.mxu0 0.0
    %469 = vmatmul.mubr.f32.gmra.mrb[0].mxu0 %v393
    %v470 = vpop.f32.mrb[0].mxu0
    %v471 = vadd.f32 %v178, %v470
    %v472 = vpop.f32.mrb[0].mxu0
    %473 = vdwg.mxu0
    %v474 = vsel %vm271, %v466, -inf
    %475 = vmax.xlane.f32.xlu0 %v474
    %v476 = vpop.xlane.xlu0 %475
    %v477 = vsel %vm271, %v471, -inf
    %478 = vmax.xlane.f32.xlu0 %v477
    %v479 = vpop.xlane.xlu0 %478
    %v480 = vsub.f32 %v466, %v476
    %v481 = vsub.f32 %v471, %v479
    %v482 = vmul.f32 %v480, 1.442695
    %v483 = vpow.pop %v482
    %v484 = vmul.f32 %v481, 1.442695
    %v485 = vpow.pop %v484
    %v486 = vsel %vm271, %v483, 0.0
    %487 = vadd.xlane.f32.xlu0 %v486
    %v488 = vpop.xlane.xlu0 %487
    %v489 = vsel %vm271, %v485, 0.0
    %490 = vadd.xlane.f32.xlu0 %v489
    %v491 = vpop.xlane.xlu0 %490
    %v492 = vrcp.pop %v488
    %v493 = vrcp.pop %v491
    %v494 = vmul.f32 %v483, %v492
    %v495 = vmul.f32 %v485, %v493
    %496 = vrot.lane.b32.xlu0 %v132, 56
    %v497 = vpop.permute.xlu0 %496
    %498 = vrot.lane.b32.xlu0 %v133, 56
    %v499 = vpop.permute.xlu0 %498
    %v503 = vsel %vm271, %v494, 0
    %v506 = vsel %vm271, %v495, 0
    %508 = vmatprep.subr.mxu0 0.0
    %509 = vmatpush1.msra.mxu0 %v497
    %510 = vmatprep.subr.mxu0 0.0
    %511 = vmatpush1.msra.mxu0 %v499
    %512 = vmatprep.subr.mxu0 0.0
    %513 = vmatpush1.msra.mxu0 0.0
    %514 = vmatprep.subr.mxu0 0.0
    %515 = vmatpush1.msra.mxu0 0.0
    %516 = vmatprep.subr.mxu0 0.0
    %517 = vmatpush1.msra.mxu0 0.0
    %518 = vmatprep.subr.mxu0 0.0
    %519 = vmatpush1.msra.mxu0 0.0
    %520 = vmatprep.subr.mxu0 0.0
    %521 = vmatpush1.msra.mxu0 0.0
    %522 = vmatprep.subr.mxu0 0.0
    %523 = vmatpush1.msra.mxu0 0.0
    %524 = vmatprep.subr.mxu0 0.0
    %525 = vmatpush1.msra.mxu0 0.0
    %526 = vmatprep.subr.mxu0 0.0
    %527 = vmatpush1.msra.mxu0 0.0
    %528 = vmatprep.subr.mxu0 0.0
    %529 = vmatpush1.msra.mxu0 0.0
    %530 = vmatprep.subr.mxu0 0.0
    %531 = vmatpush1.msra.mxu0 0.0
    %532 = vmatprep.subr.mxu0 0.0
    %533 = vmatpush1.msra.mxu0 0.0
    %534 = vmatprep.subr.mxu0 0.0
    %535 = vmatpush1.msra.mxu0 0.0
    %536 = vmatprep.subr.mxu0 0.0
    %537 = vmatpush1.msra.mxu0 0.0
    %538 = vmatprep.subr.mxu0 0.0
    %539 = vmatpush1.msra.mxu0 0.0
    %540 = vmatprep.subr.mxu0 0.0
    %541 = vmatpush1.msra.mxu0 0.0
    %542 = vmatprep.subr.mxu0 0.0
    %543 = vmatpush1.msra.mxu0 0.0
    %544 = vmatprep.subr.mxu0 0.0
    %545 = vmatpush1.msra.mxu0 0.0
    %546 = vmatprep.subr.mxu0 0.0
    %547 = vmatpush1.msra.mxu0 0.0
    %548 = vmatprep.subr.mxu0 0.0
    %549 = vmatpush1.msra.mxu0 0.0
    %550 = vmatprep.subr.mxu0 0.0
    %551 = vmatpush1.msra.mxu0 0.0
    %552 = vmatprep.subr.mxu0 0.0
    %553 = vmatpush1.msra.mxu0 0.0
    %554 = vmatprep.subr.mxu0 0.0
    %555 = vmatpush1.msra.mxu0 0.0
    %556 = vmatprep.subr.mxu0 0.0
    %557 = vmatpush1.msra.mxu0 0.0
    %558 = vmatprep.subr.mxu0 0.0
    %559 = vmatpush1.msra.mxu0 0.0
    %560 = vmatprep.subr.mxu0 0.0
    %561 = vmatpush1.msra.mxu0 0.0
    %562 = vmatprep.subr.mxu0 0.0
    %563 = vmatpush1.msra.mxu0 0.0
    %564 = vmatprep.subr.mxu0 0.0
    %565 = vmatpush1.msra.mxu0 0.0
    %566 = vmatprep.subr.mxu0 0.0
    %567 = vmatpush1.msra.mxu0 0.0
    %568 = vmatprep.subr.mxu0 0.0
    %569 = vmatpush1.msra.mxu0 0.0
    %570 = vmatprep.subr.mxu0 0.0
    %571 = vmatpush1.msra.mxu0 0.0
    %572 = vmatprep.mubr.f32.mxu0 0.0
    %573 = vmatmul.mubr.f32.gmra.mrb[0].mxu0 %v503
    %v574 = vpop.f32.mrb[0].mxu0
    %v575 = vadd.f32 0.0, %v574
    %v576 = vpop.f32.mrb[0].mxu0
    %577 = vmatprep.mubr.f32.mxu0 0.0
    %578 = vmatmul.mubr.f32.gmra.mrb[0].mxu0 %v506
    %v579 = vpop.f32.mrb[0].mxu0
    %v580 = vadd.f32 0.0, %v579
    %v581 = vpop.f32.mrb[0].mxu0
    %582 = vdwg.mxu0
    %583 = vrot.lane.b32.xlu0 %v112, 112
    %v584 = vpop.permute.xlu0 %583
    %585 = vrot.lane.b32.xlu0 %v113, 112
    %v586 = vpop.permute.xlu0 %585
    %587 = vrot.lane.b32.xlu0 %v122, 80
    %v588 = vpop.permute.xlu0 %587
    %589 = vrot.lane.b32.xlu0 %v123, 80
    %v590 = vpop.permute.xlu0 %589
    %v591 = vsel %vm185, %v584, 0
    %v593 = vsel %vm185, %v586, 0
    %v595 = vsel %vm185, %v588, 0
    %v597 = vsel %vm185, %v590, 0
    %599 = vmatprep.subr.mxu0 0.0
    %600 = vmatpush1.xpose.msra.mxu0 %v595
    %601 = vmatprep.subr.mxu0 0.0
    %602 = vmatpush1.xpose.msra.mxu0 %v597
    %603 = vmatprep.subr.mxu0 0.0
    %604 = vmatpush1.xpose.msra.mxu0 0.0
    %605 = vmatprep.subr.mxu0 0.0
    %606 = vmatpush1.xpose.msra.mxu0 0.0
    %607 = vmatprep.subr.mxu0 0.0
    %608 = vmatpush1.xpose.msra.mxu0 0.0
    %609 = vmatprep.subr.mxu0 0.0
    %610 = vmatpush1.xpose.msra.mxu0 0.0
    %611 = vmatprep.subr.mxu0 0.0
    %612 = vmatpush1.xpose.msra.mxu0 0.0
    %613 = vmatprep.subr.mxu0 0.0
    %614 = vmatpush1.xpose.msra.mxu0 0.0
    %615 = vmatprep.subr.mxu0 0.0
    %616 = vmatpush1.xpose.msra.mxu0 0.0
    %617 = vmatprep.subr.mxu0 0.0
    %618 = vmatpush1.xpose.msra.mxu0 0.0
    %619 = vmatprep.subr.mxu0 0.0
    %620 = vmatpush1.xpose.msra.mxu0 0.0
    %621 = vmatprep.subr.mxu0 0.0
    %622 = vmatpush1.xpose.msra.mxu0 0.0
    %623 = vmatprep.subr.mxu0 0.0
    %624 = vmatpush1.xpose.msra.mxu0 0.0
    %625 = vmatprep.subr.mxu0 0.0
    %626 = vmatpush1.xpose.msra.mxu0 0.0
    %627 = vmatprep.subr.mxu0 0.0
    %628 = vmatpush1.xpose.msra.mxu0 0.0
    %629 = vmatprep.subr.mxu0 0.0
    %630 = vmatpush1.xpose.msra.mxu0 0.0
    %631 = vmatprep.subr.mxu0 0.0
    %632 = vmatpush1.xpose.msra.mxu0 0.0
    %633 = vmatprep.subr.mxu0 0.0
    %634 = vmatpush1.xpose.msra.mxu0 0.0
    %635 = vmatprep.subr.mxu0 0.0
    %636 = vmatpush1.xpose.msra.mxu0 0.0
    %637 = vmatprep.subr.mxu0 0.0
    %638 = vmatpush1.xpose.msra.mxu0 0.0
    %639 = vmatprep.subr.mxu0 0.0
    %640 = vmatpush1.xpose.msra.mxu0 0.0
    %641 = vmatprep.subr.mxu0 0.0
    %642 = vmatpush1.xpose.msra.mxu0 0.0
    %643 = vmatprep.subr.mxu0 0.0
    %644 = vmatpush1.xpose.msra.mxu0 0.0
    %645 = vmatprep.subr.mxu0 0.0
    %646 = vmatpush1.xpose.msra.mxu0 0.0
    %647 = vmatprep.subr.mxu0 0.0
    %648 = vmatpush1.xpose.msra.mxu0 0.0
    %649 = vmatprep.subr.mxu0 0.0
    %650 = vmatpush1.xpose.msra.mxu0 0.0
    %651 = vmatprep.subr.mxu0 0.0
    %652 = vmatpush1.xpose.msra.mxu0 0.0
    %653 = vmatprep.subr.mxu0 0.0
    %654 = vmatpush1.xpose.msra.mxu0 0.0
    %655 = vmatprep.subr.mxu0 0.0
    %656 = vmatpush1.xpose.msra.mxu0 0.0
    %657 = vmatprep.subr.mxu0 0.0
    %658 = vmatpush1.xpose.msra.mxu0 0.0
    %659 = vmatprep.subr.mxu0 0.0
    %660 = vmatpush1.xpose.msra.mxu0 0.0
    %661 = vmatprep.subr.mxu0 0.0
    %662 = vmatpush1.xpose.msra.mxu0 0.0
    %663 = vmatprep.mubr.f32.mxu0 0.0
    %664 = vmatmul.mubr.f32.gmra.mrb[0].mxu0 %v591
    %v665 = vpop.f32.mrb[0].mxu0
    %v666 = vadd.f32 %v177, %v665
    %v667 = vpop.f32.mrb[0].mxu0
    %668 = vmatprep.mubr.f32.mxu0 0.0
    %669 = vmatmul.mubr.f32.gmra.mrb[0].mxu0 %v593
    %v670 = vpop.f32.mrb[0].mxu0
    %v671 = vadd.f32 %v178, %v670
    %v672 = vpop.f32.mrb[0].mxu0
    %673 = vdwg.mxu0
    %v674 = vsel %vm271, %v666, -inf
    %675 = vmax.xlane.f32.xlu0 %v674
    %v676 = vpop.xlane.xlu0 %675
    %v677 = vsel %vm271, %v671, -inf
    %678 = vmax.xlane.f32.xlu0 %v677
    %v679 = vpop.xlane.xlu0 %678
    %v680 = vsub.f32 %v666, %v676
    %v681 = vsub.f32 %v671, %v679
    %v682 = vmul.f32 %v680, 1.442695
    %v683 = vpow.pop %v682
    %v684 = vmul.f32 %v681, 1.442695
    %v685 = vpow.pop %v684
    %v686 = vsel %vm271, %v683, 0.0
    %687 = vadd.xlane.f32.xlu0 %v686
    %v688 = vpop.xlane.xlu0 %687
    %v689 = vsel %vm271, %v685, 0.0
    %690 = vadd.xlane.f32.xlu0 %v689
    %v691 = vpop.xlane.xlu0 %690
    %v692 = vrcp.pop %v688
    %v693 = vrcp.pop %v691
    %v694 = vmul.f32 %v683, %v692
    %v695 = vmul.f32 %v685, %v693
    %696 = vrot.lane.b32.xlu0 %v132, 48
    %v697 = vpop.permute.xlu0 %696
    %698 = vrot.lane.b32.xlu0 %v133, 48
    %v699 = vpop.permute.xlu0 %698
    %v703 = vsel %vm271, %v694, 0
    %v706 = vsel %vm271, %v695, 0
    %708 = vmatprep.subr.mxu0 0.0
    %709 = vmatpush1.msra.mxu0 %v697
    %710 = vmatprep.subr.mxu0 0.0
    %711 = vmatpush1.msra.mxu0 %v699
    %712 = vmatprep.subr.mxu0 0.0
    %713 = vmatpush1.msra.mxu0 0.0
    %714 = vmatprep.subr.mxu0 0.0
    %715 = vmatpush1.msra.mxu0 0.0
    %716 = vmatprep.subr.mxu0 0.0
    %717 = vmatpush1.msra.mxu0 0.0
    %718 = vmatprep.subr.mxu0 0.0
    %719 = vmatpush1.msra.mxu0 0.0
    %720 = vmatprep.subr.mxu0 0.0
    %721 = vmatpush1.msra.mxu0 0.0
    %722 = vmatprep.subr.mxu0 0.0
    %723 = vmatpush1.msra.mxu0 0.0
    %724 = vmatprep.subr.mxu0 0.0
    %725 = vmatpush1.msra.mxu0 0.0
    %726 = vmatprep.subr.mxu0 0.0
    %727 = vmatpush1.msra.mxu0 0.0
    %728 = vmatprep.subr.mxu0 0.0
    %729 = vmatpush1.msra.mxu0 0.0
    %730 = vmatprep.subr.mxu0 0.0
    %731 = vmatpush1.msra.mxu0 0.0
    %732 = vmatprep.subr.mxu0 0.0
    %733 = vmatpush1.msra.mxu0 0.0
    %734 = vmatprep.subr.mxu0 0.0
    %735 = vmatpush1.msra.mxu0 0.0
    %736 = vmatprep.subr.mxu0 0.0
    %737 = vmatpush1.msra.mxu0 0.0
    %738 = vmatprep.subr.mxu0 0.0
    %739 = vmatpush1.msra.mxu0 0.0
    %740 = vmatprep.subr.mxu0 0.0
    %741 = vmatpush1.msra.mxu0 0.0
    %742 = vmatprep.subr.mxu0 0.0
    %743 = vmatpush1.msra.mxu0 0.0
    %744 = vmatprep.subr.mxu0 0.0
    %745 = vmatpush1.msra.mxu0 0.0
    %746 = vmatprep.subr.mxu0 0.0
    %747 = vmatpush1.msra.mxu0 0.0
    %748 = vmatprep.subr.mxu0 0.0
    %749 = vmatpush1.msra.mxu0 0.0
    %750 = vmatprep.subr.mxu0 0.0
    %751 = vmatpush1.msra.mxu0 0.0
    %752 = vmatprep.subr.mxu0 0.0
    %753 = vmatpush1.msra.mxu0 0.0
    %754 = vmatprep.subr.mxu0 0.0
    %755 = vmatpush1.msra.mxu0 0.0
    %756 = vmatprep.subr.mxu0 0.0
    %757 = vmatpush1.msra.mxu0 0.0
    %758 = vmatprep.subr.mxu0 0.0
    %759 = vmatpush1.msra.mxu0 0.0
    %760 = vmatprep.subr.mxu0 0.0
    %761 = vmatpush1.msra.mxu0 0.0
    %762 = vmatprep.subr.mxu0 0.0
    %763 = vmatpush1.msra.mxu0 0.0
    %764 = vmatprep.subr.mxu0 0.0
    %765 = vmatpush1.msra.mxu0 0.0
    %766 = vmatprep.subr.mxu0 0.0
    %767 = vmatpush1.msra.mxu0 0.0
    %768 = vmatprep.subr.mxu0 0.0
    %769 = vmatpush1.msra.mxu0 0.0
    %770 = vmatprep.subr.mxu0 0.0
    %771 = vmatpush1.msra.mxu0 0.0
    %772 = vmatprep.mubr.f32.mxu0 0.0
    %773 = vmatmul.mubr.f32.gmra.mrb[0].mxu0 %v703
    %v774 = vpop.f32.mrb[0].mxu0
    %v775 = vadd.f32 0.0, %v774
    %v776 = vpop.f32.mrb[0].mxu0
    %777 = vmatprep.mubr.f32.mxu0 0.0
    %778 = vmatmul.mubr.f32.gmra.mrb[0].mxu0 %v706
    %v779 = vpop.f32.mrb[0].mxu0
    %v780 = vadd.f32 0.0, %v779
    %v781 = vpop.f32.mrb[0].mxu0
    %782 = vdwg.mxu0
    %783 = vrot.lane.b32.xlu0 %v112, 104
    %v784 = vpop.permute.xlu0 %783
    %785 = vrot.lane.b32.xlu0 %v113, 104
    %v786 = vpop.permute.xlu0 %785
    %787 = vrot.lane.b32.xlu0 %v122, 72
    %v788 = vpop.permute.xlu0 %787
    %789 = vrot.lane.b32.xlu0 %v123, 72
    %v790 = vpop.permute.xlu0 %789
    %v791 = vsel %vm185, %v784, 0
    %v793 = vsel %vm185, %v786, 0
    %v795 = vsel %vm185, %v788, 0
    %v797 = vsel %vm185, %v790, 0
    %799 = vmatprep.subr.mxu0 0.0
    %800 = vmatpush1.xpose.msra.mxu0 %v795
    %801 = vmatprep.subr.mxu0 0.0
    %802 = vmatpush1.xpose.msra.mxu0 %v797
    %803 = vmatprep.subr.mxu0 0.0
    %804 = vmatpush1.xpose.msra.mxu0 0.0
    %805 = vmatprep.subr.mxu0 0.0
    %806 = vmatpush1.xpose.msra.mxu0 0.0
    %807 = vmatprep.subr.mxu0 0.0
    %808 = vmatpush1.xpose.msra.mxu0 0.0
    %809 = vmatprep.subr.mxu0 0.0
    %810 = vmatpush1.xpose.msra.mxu0 0.0
    %811 = vmatprep.subr.mxu0 0.0
    %812 = vmatpush1.xpose.msra.mxu0 0.0
    %813 = vmatprep.subr.mxu0 0.0
    %814 = vmatpush1.xpose.msra.mxu0 0.0
    %815 = vmatprep.subr.mxu0 0.0
    %816 = vmatpush1.xpose.msra.mxu0 0.0
    %817 = vmatprep.subr.mxu0 0.0
    %818 = vmatpush1.xpose.msra.mxu0 0.0
    %819 = vmatprep.subr.mxu0 0.0
    %820 = vmatpush1.xpose.msra.mxu0 0.0
    %821 = vmatprep.subr.mxu0 0.0
    %822 = vmatpush1.xpose.msra.mxu0 0.0
    %823 = vmatprep.subr.mxu0 0.0
    %824 = vmatpush1.xpose.msra.mxu0 0.0
    %825 = vmatprep.subr.mxu0 0.0
    %826 = vmatpush1.xpose.msra.mxu0 0.0
    %827 = vmatprep.subr.mxu0 0.0
    %828 = vmatpush1.xpose.msra.mxu0 0.0
    %829 = vmatprep.subr.mxu0 0.0
    %830 = vmatpush1.xpose.msra.mxu0 0.0
    %831 = vmatprep.subr.mxu0 0.0
    %832 = vmatpush1.xpose.msra.mxu0 0.0
    %833 = vmatprep.subr.mxu0 0.0
    %834 = vmatpush1.xpose.msra.mxu0 0.0
    %835 = vmatprep.subr.mxu0 0.0
    %836 = vmatpush1.xpose.msra.mxu0 0.0
    %837 = vmatprep.subr.mxu0 0.0
    %838 = vmatpush1.xpose.msra.mxu0 0.0
    %839 = vmatprep.subr.mxu0 0.0
    %840 = vmatpush1.xpose.msra.mxu0 0.0
    %841 = vmatprep.subr.mxu0 0.0
    %842 = vmatpush1.xpose.msra.mxu0 0.0
    %843 = vmatprep.subr.mxu0 0.0
    %844 = vmatpush1.xpose.msra.mxu0 0.0
    %845 = vmatprep.subr.mxu0 0.0
    %846 = vmatpush1.xpose.msra.mxu0 0.0
    %847 = vmatprep.subr.mxu0 0.0
    %848 = vmatpush1.xpose.msra.mxu0 0.0
    %849 = vmatprep.subr.mxu0 0.0
    %850 = vmatpush1.xpose.msra.mxu0 0.0
    %851 = vmatprep.subr.mxu0 0.0
    %852 = vmatpush1.xpose.msra.mxu0 0.0
    %853 = vmatprep.subr.mxu0 0.0
    %854 = vmatpush1.xpose.msra.mxu0 0.0
    %855 = vmatprep.subr.mxu0 0.0
    %856 = vmatpush1.xpose.msra.mxu0 0.0
    %857 = vmatprep.subr.mxu0 0.0
    %858 = vmatpush1.xpose.msra.mxu0 0.0
    %859 = vmatprep.subr.mxu0 0.0
    %860 = vmatpush1.xpose.msra.mxu0 0.0
    %861 = vmatprep.subr.mxu0 0.0
    %862 = vmatpush1.xpose.msra.mxu0 0.0
    %863 = vmatprep.mubr.f32.mxu0 0.0
    %864 = vmatmul.mubr.f32.gmra.mrb[0].mxu0 %v791
    %v865 = vpop.f32.mrb[0].mxu0
    %v866 = vadd.f32 %v177, %v865
    %v867 = vpop.f32.mrb[0].mxu0
    %868 = vmatprep.mubr.f32.mxu0 0.0
    %869 = vmatmul.mubr.f32.gmra.mrb[0].mxu0 %v793
    %v870 = vpop.f32.mrb[0].mxu0
    %v871 = vadd.f32 %v178, %v870
    %v872 = vpop.f32.mrb[0].mxu0
    %873 = vdwg.mxu0
    %v874 = vsel %vm271, %v866, -inf
    %875 = vmax.xlane.f32.xlu0 %v874
    %v876 = vpop.xlane.xlu0 %875
    %v877 = vsel %vm271, %v871, -inf
    %878 = vmax.xlane.f32.xlu0 %v877
    %v879 = vpop.xlane.xlu0 %878
    %v880 = vsub.f32 %v866, %v876
    %v881 = vsub.f32 %v871, %v879
    %v882 = vmul.f32 %v880, 1.442695
    %v883 = vpow.pop %v882
    %v884 = vmul.f32 %v881, 1.442695
    %v885 = vpow.pop %v884
    %v886 = vsel %vm271, %v883, 0.0
    %887 = vadd.xlane.f32.xlu0 %v886
    %v888 = vpop.xlane.xlu0 %887
    %v889 = vsel %vm271, %v885, 0.0
    %890 = vadd.xlane.f32.xlu0 %v889
    %v891 = vpop.xlane.xlu0 %890
    %v892 = vrcp.pop %v888
    %v893 = vrcp.pop %v891
    %v894 = vmul.f32 %v883, %v892
    %v895 = vmul.f32 %v885, %v893
    %896 = vrot.lane.b32.xlu0 %v132, 40
    %v897 = vpop.permute.xlu0 %896
    %898 = vrot.lane.b32.xlu0 %v133, 40
    %v899 = vpop.permute.xlu0 %898
    %v903 = vsel %vm271, %v894, 0
    %v906 = vsel %vm271, %v895, 0
    %908 = vmatprep.subr.mxu0 0.0
    %909 = vmatpush1.msra.mxu0 %v897
    %910 = vmatprep.subr.mxu0 0.0
    %911 = vmatpush1.msra.mxu0 %v899
    %912 = vmatprep.subr.mxu0 0.0
    %913 = vmatpush1.msra.mxu0 0.0
    %914 = vmatprep.subr.mxu0 0.0
    %915 = vmatpush1.msra.mxu0 0.0
    %916 = vmatprep.subr.mxu0 0.0
    %917 = vmatpush1.msra.mxu0 0.0
    %918 = vmatprep.subr.mxu0 0.0
    %919 = vmatpush1.msra.mxu0 0.0
    %920 = vmatprep.subr.mxu0 0.0
    %921 = vmatpush1.msra.mxu0 0.0
    %922 = vmatprep.subr.mxu0 0.0
    %923 = vmatpush1.msra.mxu0 0.0
    %924 = vmatprep.subr.mxu0 0.0
    %925 = vmatpush1.msra.mxu0 0.0
    %926 = vmatprep.subr.mxu0 0.0
    %927 = vmatpush1.msra.mxu0 0.0
    %928 = vmatprep.subr.mxu0 0.0
    %929 = vmatpush1.msra.mxu0 0.0
    %930 = vmatprep.subr.mxu0 0.0
    %931 = vmatpush1.msra.mxu0 0.0
    %932 = vmatprep.subr.mxu0 0.0
    %933 = vmatpush1.msra.mxu0 0.0
    %934 = vmatprep.subr.mxu0 0.0
    %935 = vmatpush1.msra.mxu0 0.0
    %936 = vmatprep.subr.mxu0 0.0
    %937 = vmatpush1.msra.mxu0 0.0
    %938 = vmatprep.subr.mxu0 0.0
    %939 = vmatpush1.msra.mxu0 0.0
    %940 = vmatprep.subr.mxu0 0.0
    %941 = vmatpush1.msra.mxu0 0.0
    %942 = vmatprep.subr.mxu0 0.0
    %943 = vmatpush1.msra.mxu0 0.0
    %944 = vmatprep.subr.mxu0 0.0
    %945 = vmatpush1.msra.mxu0 0.0
    %946 = vmatprep.subr.mxu0 0.0
    %947 = vmatpush1.msra.mxu0 0.0
    %948 = vmatprep.subr.mxu0 0.0
    %949 = vmatpush1.msra.mxu0 0.0
    %950 = vmatprep.subr.mxu0 0.0
    %951 = vmatpush1.msra.mxu0 0.0
    %952 = vmatprep.subr.mxu0 0.0
    %953 = vmatpush1.msra.mxu0 0.0
    %954 = vmatprep.subr.mxu0 0.0
    %955 = vmatpush1.msra.mxu0 0.0
    %956 = vmatprep.subr.mxu0 0.0
    %957 = vmatpush1.msra.mxu0 0.0
    %958 = vmatprep.subr.mxu0 0.0
    %959 = vmatpush1.msra.mxu0 0.0
    %960 = vmatprep.subr.mxu0 0.0
    %961 = vmatpush1.msra.mxu0 0.0
    %962 = vmatprep.subr.mxu0 0.0
    %963 = vmatpush1.msra.mxu0 0.0
    %964 = vmatprep.subr.mxu0 0.0
    %965 = vmatpush1.msra.mxu0 0.0
    %966 = vmatprep.subr.mxu0 0.0
    %967 = vmatpush1.msra.mxu0 0.0
    %968 = vmatprep.subr.mxu0 0.0
    %969 = vmatpush1.msra.mxu0 0.0
    %970 = vmatprep.subr.mxu0 0.0
    %971 = vmatpush1.msra.mxu0 0.0
    %972 = vmatprep.mubr.f32.mxu0 0.0
    %973 = vmatmul.mubr.f32.gmra.mrb[0].mxu0 %v903
    %v974 = vpop.f32.mrb[0].mxu0
    %v975 = vadd.f32 0.0, %v974
    %v976 = vpop.f32.mrb[0].mxu0
    %977 = vmatprep.mubr.f32.mxu0 0.0
    %978 = vmatmul.mubr.f32.gmra.mrb[0].mxu0 %v906
    %v979 = vpop.f32.mrb[0].mxu0
    %v980 = vadd.f32 0.0, %v979
    %v981 = vpop.f32.mrb[0].mxu0
    %982 = vdwg.mxu0
    %985 = vrot.lane.b32.xlu0 %v575, 8
    %v986 = vpop.permute.xlu0 %985
    %987 = vrot.lane.b32.xlu0 %v580, 8
    %v988 = vpop.permute.xlu0 %987
    %993 = vrot.lane.b32.xlu0 %v775, 16
    %v994 = vpop.permute.xlu0 %993
    %995 = vrot.lane.b32.xlu0 %v780, 16
    %v996 = vpop.permute.xlu0 %995
    %1001 = vrot.lane.b32.xlu0 %v975, 24
    %v1002 = vpop.permute.xlu0 %1001
    %1003 = vrot.lane.b32.xlu0 %v980, 24
    %v1004 = vpop.permute.xlu0 %1003
    %v1007 = vsel %vm185, %v375, %v986
    %v1008 = vsel %vm185, %v380, %v988
    %v1009 = vsel %vm271, %v1007, %v994
    %v1010 = vsel %vm271, %v1008, %v996
    %vm1011 = vcmask 195584
    %v1012 = vsel %vm1011, %v1009, %v1002
    %v1013 = vsel %vm1011, %v1010, %v1004
    %v1014 = vld [vmem:[%s2] sm:$0xff]
    %v1015 = vld [vmem:[%s2 + $0x8] sm:$0xff]
    %v1016 = vld [vmem:[%s2 + $0x10] sm:$0xff]
    %v1017 = vld [vmem:[%s2 + $0x18] sm:$0xff]
    %v1018 = vlaneseq
    %v1019 = vshrl.u32 %v1018, 7
    %v1020 = vsub.s32 3, %v1019
    %v1021 = vrot.slane %v20, %v1020
    %v1023 = vsel %vm26, %v1012, 0
    %v1026 = vsel %vm26, %v1013, 0
    %1028 = vmatprep.subr.mxu0 0.0
    %1029 = vmatpush1.msra.mxu0 %v1014
    %1030 = vmatprep.subr.mxu0 0.0
    %1031 = vmatpush1.msra.mxu0 %v1015
    %1032 = vmatprep.subr.mxu0 0.0
    %1033 = vmatpush1.msra.mxu0 %v1016
    %1034 = vmatprep.subr.mxu0 0.0
    %1035 = vmatpush1.msra.mxu0 %v1017
    %1036 = vmatprep.subr.mxu0 0.0
    %1037 = vmatpush1.msra.mxu0 0.0
    %1038 = vmatprep.subr.mxu0 0.0
    %1039 = vmatpush1.msra.mxu0 0.0
    %1040 = vmatprep.subr.mxu0 0.0
    %1041 = vmatpush1.msra.mxu0 0.0
    %1042 = vmatprep.subr.mxu0 0.0
    %1043 = vmatpush1.msra.mxu0 0.0
    %1044 = vmatprep.subr.mxu0 0.0
    %1045 = vmatpush1.msra.mxu0 0.0
    %1046 = vmatprep.subr.mxu0 0.0
    %1047 = vmatpush1.msra.mxu0 0.0
    %1048 = vmatprep.subr.mxu0 0.0
    %1049 = vmatpush1.msra.mxu0 0.0
    %1050 = vmatprep.subr.mxu0 0.0
    %1051 = vmatpush1.msra.mxu0 0.0
    %1052 = vmatprep.subr.mxu0 0.0
    %1053 = vmatpush1.msra.mxu0 0.0
    %1054 = vmatprep.subr.mxu0 0.0
    %1055 = vmatpush1.msra.mxu0 0.0
    %1056 = vmatprep.subr.mxu0 0.0
    %1057 = vmatpush1.msra.mxu0 0.0
    %1058 = vmatprep.subr.mxu0 0.0
    %1059 = vmatpush1.msra.mxu0 0.0
    %1060 = vmatprep.subr.mxu0 0.0
    %1061 = vmatpush1.msra.mxu0 0.0
    %1062 = vmatprep.subr.mxu0 0.0
    %1063 = vmatpush1.msra.mxu0 0.0
    %1064 = vmatprep.subr.mxu0 0.0
    %1065 = vmatpush1.msra.mxu0 0.0
    %1066 = vmatprep.subr.mxu0 0.0
    %1067 = vmatpush1.msra.mxu0 0.0
    %1068 = vmatprep.subr.mxu0 0.0
    %1069 = vmatpush1.msra.mxu0 0.0
    %1070 = vmatprep.subr.mxu0 0.0
    %1071 = vmatpush1.msra.mxu0 0.0
    %1072 = vmatprep.subr.mxu0 0.0
    %1073 = vmatpush1.msra.mxu0 0.0
    %1074 = vmatprep.subr.mxu0 0.0
    %1075 = vmatpush1.msra.mxu0 0.0
    %1076 = vmatprep.subr.mxu0 0.0
    %1077 = vmatpush1.msra.mxu0 0.0
    %1078 = vmatprep.subr.mxu0 0.0
    %1079 = vmatpush1.msra.mxu0 0.0
    %1080 = vmatprep.subr.mxu0 0.0
    %1081 = vmatpush1.msra.mxu0 0.0
    %1082 = vmatprep.subr.mxu0 0.0
    %1083 = vmatpush1.msra.mxu0 0.0
    %1084 = vmatprep.subr.mxu0 0.0
    %1085 = vmatpush1.msra.mxu0 0.0
    %1086 = vmatprep.subr.mxu0 0.0
    %1087 = vmatpush1.msra.mxu0 0.0
    %1088 = vmatprep.subr.mxu0 0.0
    %1089 = vmatpush1.msra.mxu0 0.0
    %1090 = vmatprep.subr.mxu0 0.0
    %1091 = vmatpush1.msra.mxu0 0.0
    %1092 = vmatprep.mubr.f32.mxu0 0.0
    %1093 = vmatmul.mubr.f32.gmra.mrb[0].mxu0 %v1023
    %v1094 = vpop.f32.mrb[0].mxu0
    %v1095 = vadd.f32 %v1021, %v1094
    %v1096 = vpop.f32.mrb[0].mxu0
    %1097 = vmatprep.mubr.f32.mxu0 0.0
    %1098 = vmatmul.mubr.f32.gmra.mrb[0].mxu0 %v1026
    %v1099 = vpop.f32.mrb[0].mxu0
    %v1100 = vadd.f32 %v1021, %v1099
    %v1101 = vpop.f32.mrb[0].mxu0
    %1102 = vdwg.mxu0
    %v1103 = vadd.f32 %v18, %v1095
    %v1104 = vadd.f32 %v19, %v1100
    %v1105 = vsel %vm26, %v1103, 0.0
    %1106 = vadd.xlane.f32.xlu0 %v1105
    %v1107 = vpop.xlane.xlu0 %1106
    %v1108 = vsel %vm26, %v1104, 0.0
    %1109 = vadd.xlane.f32.xlu0 %v1108
    %v1110 = vpop.xlane.xlu0 %1109
    %v1111 = vrcp.pop 32.0
    %v1112 = vmul.f32 %v1107, %v1111
    %v1113 = vmul.f32 %v1110, %v1111
    %v1114 = vsub.f32 %v1103, %v1112
    %v1115 = vsub.f32 %v1104, %v1113
    %v1116 = vmul.f32 %v1114, %v1114
    %v1117 = vmul.f32 %v1115, %v1115
    %v1118 = vsel %vm26, %v1116, 0.0
    %1119 = vadd.xlane.f32.xlu0 %v1118
    %v1120 = vpop.xlane.xlu0 %1119
    %v1121 = vsel %vm26, %v1117, 0.0
    %1122 = vadd.xlane.f32.xlu0 %v1121
    %v1123 = vpop.xlane.xlu0 %1122
    %v1124 = vmul.f32 %v1120, %v1111
    %v1125 = vmul.f32 %v1123, %v1111
    %v1126 = vadd.f32 %v1124, 1e-05
    %v1127 = vadd.f32 %v1125, 1e-05
    %v1128 = vrsqrt.pop %v1126
    %v1129 = vrsqrt.pop %v1127
    %v1130 = vmul.f32 %v1114, %v1128
    %v1131 = vmul.f32 %v1115, %v1129
    %v1132 = vlaneseq
    %v1133 = vshrl.u32 %v1132, 7
    %v1134 = vsub.s32 4, %v1133
    %v1135 = vrot.slane %v20, %v1134
    %v1136 = vmul.f32 %v1130, %v1135
    %v1137 = vmul.f32 %v1131, %v1135
    %v1138 = vlaneseq
    %v1139 = vshrl.u32 %v1138, 7
    %v1140 = vsub.s32 5, %v1139
    %v1141 = vrot.slane %v20, %v1140
    %v1142 = vadd.f32 %v1136, %v1141
    %v1143 = vadd.f32 %v1137, %v1141
    %v1144 = vld [vmem:[%s2 + $0x20] sm:$0xff]
    %v1145 = vld [vmem:[%s2 + $0x28] sm:$0xff]
    %v1146 = vld [vmem:[%s2 + $0x30] sm:$0xff]
    %v1147 = vld [vmem:[%s2 + $0x38] sm:$0xff]
    %v1148 = vlaneseq
    %v1149 = vshrl.u32 %v1148, 7
    %v1150 = vsub.s32 6, %v1149
    %v1151 = vrot.slane %v20, %v1150
    %v1153 = vsel %vm26, %v1142, 0
    %v1156 = vsel %vm26, %v1143, 0
    %1158 = vmatprep.subr.mxu0 0.0
    %1159 = vmatpush1.msra.mxu0 %v1144
    %1160 = vmatprep.subr.mxu0 0.0
    %1161 = vmatpush1.msra.mxu0 %v1145
    %1162 = vmatprep.subr.mxu0 0.0
    %1163 = vmatpush1.msra.mxu0 %v1146
    %1164 = vmatprep.subr.mxu0 0.0
    %1165 = vmatpush1.msra.mxu0 %v1147
    %1166 = vmatprep.subr.mxu0 0.0
    %1167 = vmatpush1.msra.mxu0 0.0
    %1168 = vmatprep.subr.mxu0 0.0
    %1169 = vmatpush1.msra.mxu0 0.0
    %1170 = vmatprep.subr.mxu0 0.0
    %1171 = vmatpush1.msra.mxu0 0.0
    %1172 = vmatprep.subr.mxu0 0.0
    %1173 = vmatpush1.msra.mxu0 0.0
    %1174 = vmatprep.subr.mxu0 0.0
    %1175 = vmatpush1.msra.mxu0 0.0
    %1176 = vmatprep.subr.mxu0 0.0
    %1177 = vmatpush1.msra.mxu0 0.0
    %1178 = vmatprep.subr.mxu0 0.0
    %1179 = vmatpush1.msra.mxu0 0.0
    %1180 = vmatprep.subr.mxu0 0.0
    %1181 = vmatpush1.msra.mxu0 0.0
    %1182 = vmatprep.subr.mxu0 0.0
    %1183 = vmatpush1.msra.mxu0 0.0
    %1184 = vmatprep.subr.mxu0 0.0
    %1185 = vmatpush1.msra.mxu0 0.0
    %1186 = vmatprep.subr.mxu0 0.0
    %1187 = vmatpush1.msra.mxu0 0.0
    %1188 = vmatprep.subr.mxu0 0.0
    %1189 = vmatpush1.msra.mxu0 0.0
    %1190 = vmatprep.subr.mxu0 0.0
    %1191 = vmatpush1.msra.mxu0 0.0
    %1192 = vmatprep.subr.mxu0 0.0
    %1193 = vmatpush1.msra.mxu0 0.0
    %1194 = vmatprep.subr.mxu0 0.0
    %1195 = vmatpush1.msra.mxu0 0.0
    %1196 = vmatprep.subr.mxu0 0.0
    %1197 = vmatpush1.msra.mxu0 0.0
    %1198 = vmatprep.subr.mxu0 0.0
    %1199 = vmatpush1.msra.mxu0 0.0
    %1200 = vmatprep.subr.mxu0 0.0
    %1201 = vmatpush1.msra.mxu0 0.0
    %1202 = vmatprep.subr.mxu0 0.0
    %1203 = vmatpush1.msra.mxu0 0.0
    %1204 = vmatprep.subr.mxu0 0.0
    %1205 = vmatpush1.msra.mxu0 0.0
    %1206 = vmatprep.subr.mxu0 0.0
    %1207 = vmatpush1.msra.mxu0 0.0
    %1208 = vmatprep.subr.mxu0 0.0
    %1209 = vmatpush1.msra.mxu0 0.0
    %1210 = vmatprep.subr.mxu0 0.0
    %1211 = vmatpush1.msra.mxu0 0.0
    %1212 = vmatprep.subr.mxu0 0.0
    %1213 = vmatpush1.msra.mxu0 0.0
    %1214 = vmatprep.subr.mxu0 0.0
    %1215 = vmatpush1.msra.mxu0 0.0
    %1216 = vmatprep.subr.mxu0 0.0
    %1217 = vmatpush1.msra.mxu0 0.0
    %1218 = vmatprep.subr.mxu0 0.0
    %1219 = vmatpush1.msra.mxu0 0.0
    %1220 = vmatprep.subr.mxu0 0.0
    %1221 = vmatpush1.msra.mxu0 0.0
    %1222 = vmatprep.mubr.f32.mxu0 0.0
    %1223 = vmatmul.mubr.f32.gmra.mrb[0].mxu0 %v1153
    %v1224 = vpop.f32.mrb[0].mxu0
    %v1225 = vadd.f32 %v1151, %v1224
    %v1226 = vpop.f32.mrb[0].mxu0
    %1227 = vmatprep.mubr.f32.mxu0 0.0
    %1228 = vmatmul.mubr.f32.gmra.mrb[0].mxu0 %v1156
    %v1229 = vpop.f32.mrb[0].mxu0
    %v1230 = vadd.f32 %v1151, %v1229
    %v1231 = vpop.f32.mrb[0].mxu0
    %1232 = vdwg.mxu0
    %v1233 = vmax.f32 %v1225, 0.0
    %v1234 = vmax.f32 %v1230, 0.0
    %v1235 = vld [vmem:[%s2 + $0x40] sm:$0xff]
    %v1236 = vld [vmem:[%s2 + $0x48] sm:$0xff]
    %v1237 = vld [vmem:[%s2 + $0x50] sm:$0xff]
    %v1238 = vld [vmem:[%s2 + $0x58] sm:$0xff]
    %v1239 = vlaneseq
    %v1240 = vshrl.u32 %v1239, 7
    %v1241 = vsub.s32 7, %v1240
    %v1242 = vrot.slane %v20, %v1241
    %v1244 = vsel %vm26, %v1233, 0
    %v1247 = vsel %vm26, %v1234, 0
    %1249 = vmatprep.subr.mxu0 0.0
    %1250 = vmatpush1.msra.mxu0 %v1235
    %1251 = vmatprep.subr.mxu0 0.0
    %1252 = vmatpush1.msra.mxu0 %v1236
    %1253 = vmatprep.subr.mxu0 0.0
    %1254 = vmatpush1.msra.mxu0 %v1237
    %1255 = vmatprep.subr.mxu0 0.0
    %1256 = vmatpush1.msra.mxu0 %v1238
    %1257 = vmatprep.subr.mxu0 0.0
    %1258 = vmatpush1.msra.mxu0 0.0
    %1259 = vmatprep.subr.mxu0 0.0
    %1260 = vmatpush1.msra.mxu0 0.0
    %1261 = vmatprep.subr.mxu0 0.0
    %1262 = vmatpush1.msra.mxu0 0.0
    %1263 = vmatprep.subr.mxu0 0.0
    %1264 = vmatpush1.msra.mxu0 0.0
    %1265 = vmatprep.subr.mxu0 0.0
    %1266 = vmatpush1.msra.mxu0 0.0
    %1267 = vmatprep.subr.mxu0 0.0
    %1268 = vmatpush1.msra.mxu0 0.0
    %1269 = vmatprep.subr.mxu0 0.0
    %1270 = vmatpush1.msra.mxu0 0.0
    %1271 = vmatprep.subr.mxu0 0.0
    %1272 = vmatpush1.msra.mxu0 0.0
    %1273 = vmatprep.subr.mxu0 0.0
    %1274 = vmatpush1.msra.mxu0 0.0
    %1275 = vmatprep.subr.mxu0 0.0
    %1276 = vmatpush1.msra.mxu0 0.0
    %1277 = vmatprep.subr.mxu0 0.0
    %1278 = vmatpush1.msra.mxu0 0.0
    %1279 = vmatprep.subr.mxu0 0.0
    %1280 = vmatpush1.msra.mxu0 0.0
    %1281 = vmatprep.subr.mxu0 0.0
    %1282 = vmatpush1.msra.mxu0 0.0
    %1283 = vmatprep.subr.mxu0 0.0
    %1284 = vmatpush1.msra.mxu0 0.0
    %1285 = vmatprep.subr.mxu0 0.0
    %1286 = vmatpush1.msra.mxu0 0.0
    %1287 = vmatprep.subr.mxu0 0.0
    %1288 = vmatpush1.msra.mxu0 0.0
    %1289 = vmatprep.subr.mxu0 0.0
    %1290 = vmatpush1.msra.mxu0 0.0
    %1291 = vmatprep.subr.mxu0 0.0
    %1292 = vmatpush1.msra.mxu0 0.0
    %1293 = vmatprep.subr.mxu0 0.0
    %1294 = vmatpush1.msra.mxu0 0.0
    %1295 = vmatprep.subr.mxu0 0.0
    %1296 = vmatpush1.msra.mxu0 0.0
    %1297 = vmatprep.subr.mxu0 0.0
    %1298 = vmatpush1.msra.mxu0 0.0
    %1299 = vmatprep.subr.mxu0 0.0
    %1300 = vmatpush1.msra.mxu0 0.0
    %1301 = vmatprep.subr.mxu0 0.0
    %1302 = vmatpush1.msra.mxu0 0.0
    %1303 = vmatprep.subr.mxu0 0.0
    %1304 = vmatpush1.msra.mxu0 0.0
    %1305 = vmatprep.subr.mxu0 0.0
    %1306 = vmatpush1.msra.mxu0 0.0
    %1307 = vmatprep.subr.mxu0 0.0
    %1308 = vmatpush1.msra.mxu0 0.0
    %1309 = vmatprep.subr.mxu0 0.0
    %1310 = vmatpush1.msra.mxu0 0.0
    %1311 = vmatprep.subr.mxu0 0.0
    %1312 = vmatpush1.msra.mxu0 0.0
    %1313 = vmatprep.mubr.f32.mxu0 0.0
    %1314 = vmatmul.mubr.f32.gmra.mrb[0].mxu0 %v1244
    %v1315 = vpop.f32.mrb[0].mxu0
    %v1316 = vadd.f32 %v1242, %v1315
    %v1317 = vpop.f32.mrb[0].mxu0
    %1318 = vmatprep.mubr.f32.mxu0 0.0
    %1319 = vmatmul.mubr.f32.gmra.mrb[0].mxu0 %v1247
    %v1320 = vpop.f32.mrb[0].mxu0
    %v1321 = vadd.f32 %v1242, %v1320
    %v1322 = vpop.f32.mrb[0].mxu0
    %1323 = vdwg.mxu0
    %v1324 = vadd.f32 %v1142, %v1316
    %v1325 = vadd.f32 %v1143, %v1321
    %v1326 = vsel %vm26, %v1324, 0.0
    %1327 = vadd.xlane.f32.xlu0 %v1326
    %v1328 = vpop.xlane.xlu0 %1327
    %v1329 = vsel %vm26, %v1325, 0.0
    %1330 = vadd.xlane.f32.xlu0 %v1329
    %v1331 = vpop.xlane.xlu0 %1330
    %v1332 = vmul.f32 %v1328, %v1111
    %v1333 = vmul.f32 %v1331, %v1111
    %v1334 = vsub.f32 %v1324, %v1332
    %v1335 = vsub.f32 %v1325, %v1333
    %v1336 = vmul.f32 %v1334, %v1334
    %v1337 = vmul.f32 %v1335, %v1335
    %v1338 = vsel %vm26, %v1336, 0.0
    %1339 = vadd.xlane.f32.xlu0 %v1338
    %v1340 = vpop.xlane.xlu0 %1339
    %v1341 = vsel %vm26, %v1337, 0.0
    %1342 = vadd.xlane.f32.xlu0 %v1341
    %v1343 = vpop.xlane.xlu0 %1342
    %v1344 = vmul.f32 %v1340, %v1111
    %v1345 = vmul.f32 %v1343, %v1111
    %v1346 = vadd.f32 %v1344, 1e-05
    %v1347 = vadd.f32 %v1345, 1e-05
    %v1348 = vrsqrt.pop %v1346
    %v1349 = vrsqrt.pop %v1347
    %v1350 = vmul.f32 %v1334, %v1348
    %v1351 = vmul.f32 %v1335, %v1349
    %v1352 = vlaneseq
    %v1353 = vshrl.u32 %v1352, 7
    %v1354 = vsub.s32 0, %v1353
    %v1355 = vrot.slane %v21, %v1354
    %v1356 = vmul.f32 %v1350, %v1355
    %v1357 = vmul.f32 %v1351, %v1355
    %v1358 = vlaneseq
    %v1359 = vshrl.u32 %v1358, 7
    %v1360 = vsub.s32 1, %v1359
    %v1361 = vrot.slane %v21, %v1360
    %v1362 = vadd.f32 %v1356, %v1361
    %v1363 = vadd.f32 %v1357, %v1361
    %1364 = vst.msk [vmem:[#allocation2] sm:$0xff] %vm26, %v1362
    %1365 = vst.msk [vmem:[#allocation2 + $0x8] sm:$0xff] %vm26, %v1363
    // Predicated region
    $region18: #{tpu_custom_call.1} parent=1 // pred_check
      _
    $region19: #{tpu_custom_call.1} parent=1 // pred_check_branch
      %1367 = sbr.rel (0) target = $region21
    $region20: #{tpu_custom_call.1} parent=1 // pred_region
      %s1369 = ssub.s32 256, 256
      %1370 = vsyncadd [#allocation3], %s1369
      %s1371 = sshll.u32 [#allocation2], 4
      %s1372 = int_to_ptr.vmem [resolvable:$true] %s1371
      %1377 = dma.vmem_to_hbm [thread:$0]  %s1372, 256, %s4, [#allocation3], 128, 128, 8
    $region21: #{tpu_custom_call.1} parent=1 // pred_fallthru
      _
    // Predicated region
    $region22: #{tpu_custom_call.1} parent=1 // pred_check
      _
    $region23: #{tpu_custom_call.1} parent=1 // pred_check_branch
      %1379 = sbr.rel (0) target = $region25
    $region24: #{tpu_custom_call.1} parent=1 // pred_region
      %1380 = dma.done [#allocation3], 256
    $region25: #{tpu_custom_call.1} parent=1 // pred_fallthru
      _
    %1381 = vsyncpa [#allocation3], 1

</llo_original>
